<compile_context>
chip_gen: v7x
topology: tpu7x:2x2x1
jax: 0.10.0
libtpu: 0.0.40
codegen_flags: <defaults>
</compile_context>

<pallas_src>
import functools

import jax
import jax.numpy as jnp
from jax.experimental import pallas as pl
from jax.experimental.pallas import tpu as pltpu


def _round_up(x, m):
    return (x + m - 1) // m * m


def _decoder_block_kernel(
    tgt_ref, s_ref, c_ref,          # activations: [TB, d_model], [TB, Hp], [TB, 2H]
    w_all_ref,                      # [d_model, 3Hp] = [W_z | W_r | W]  (pre-transposed, padded)
    u_zr_ref,                       # [Hp, 2Hp]     = [U_z | U_r]       (pre-transposed, padded)
    u_ref,                          # [Hp, Hp]
    cmat_ref,                       # [2H, Hp]
    b_all_ref,                      # [1, 3Hp] fused biases (z | r | s_i)
    out_ref,                        # [TB, Hp]
    *, hidden_pad,
):
    f32 = jnp.float32
    Hp = hidden_pad
    mm = w_all_ref.dtype            # matmul operand dtype (bf16 default, f32 debug)

    s_f32 = s_ref[...]              # single load; f32 view for gating / final blend

    # --- 4 MXU pushes total; bias slab folded into the first one -----------
    tgt_proj = jnp.dot(tgt_ref[...].astype(mm), w_all_ref[...],
                       preferred_element_type=f32) + b_all_ref[...]     # [TB, 3Hp]
    s_proj = jnp.dot(s_f32.astype(mm), u_zr_ref[...],
                     preferred_element_type=f32)                        # [TB, 2Hp]
    c_proj = jnp.dot(c_ref[...].astype(mm), cmat_ref[...],
                     preferred_element_type=f32)                        # [TB, Hp]

    # --- gates (f32 elementwise; sigmoid/tanh go to the EUP) ---------------
    # Slab slices are lane-aligned because Hp % 128 == 0.
    z = jax.nn.sigmoid(tgt_proj[:, :Hp] + s_proj[:, :Hp])
    r = jax.nn.sigmoid(tgt_proj[:, Hp:2 * Hp] + s_proj[:, Hp:]) * s_f32

    # data-dependent 4th matmul: U(r)
    r_proj = jnp.dot(r.astype(mm), u_ref[...], preferred_element_type=f32)

    s_i = jnp.tanh(tgt_proj[:, 2 * Hp:] + r_proj + c_proj)

    out_ref[...] = ((1.0 - z) * s_f32 + z * s_i).astype(out_ref.dtype)


def prepare_decoder_params(params, matmul_dtype=jnp.bfloat16):
    """One-time packing: transpose to [in, out], pad each gate slab to a multiple
    of 128 lanes, fuse along N, and pre-sum biases into one [1, 3Hp] slab.

    Call once at init / outside the decode loop so no per-step transposes,
    pads, or concatenations hit HBM.
    """
    H = params["U_w"].shape[0]
    Hp = _round_up(H, 128)
    pad_h = Hp - H

    def wt(name, pad_in=0):
        w = params[name + "_w"].T                                   # [in, H]
        w = jnp.pad(w, ((0, pad_in), (0, pad_h)))                   # [in(+pad), Hp]
        return w.astype(matmul_dtype)

    def b(name):
        return params[name + "_b"].astype(jnp.float32)

    b_all = jnp.concatenate([
        jnp.pad(b("W_z") + b("U_z"), (0, pad_h)),
        jnp.pad(b("W_r") + b("U_r"), (0, pad_h)),
        jnp.pad(b("W") + b("U") + b("C"), (0, pad_h)),
    ]).reshape(1, 3 * Hp)

    return {
        "hidden_size": H,
        "hidden_pad": Hp,
        "w_all": jnp.concatenate([wt("W_z"), wt("W_r"), wt("W")], axis=1),   # [d, 3Hp]
        "u_zr":  jnp.concatenate([wt("U_z", pad_h), wt("U_r", pad_h)], axis=1),  # [Hp, 2Hp]
        "u":     wt("U", pad_h),                                             # [Hp, Hp]
        "cmat":  wt("C"),                                                    # [2H, Hp]
        "b_all": b_all,                                                      # [1, 3Hp]
    }


def decoder_block(tgt, s, c, packed, *, batch_tile_cap=256):
    """tgt: [B, d_model], s: [B, H], c: [B, 2H] -> [B, H] (float32)."""
    B, d_model = tgt.shape
    H = packed["hidden_size"]
    Hp = packed["hidden_pad"]
    C2 = c.shape[1]

    # Feature-pad s so gate slabs / output stay lane-dense (zero columns feed
    # zero weight rows, so they contribute nothing and are sliced off below).
    if Hp != H:
        s = jnp.pad(s, ((0, 0), (0, Hp - H)))

    # Wrapper-side batch padding: round to sublane (8), cap the tile, pad B up
    # to a whole number of tiles (padded rows never leave the wrapper).
    # (On v5e a cap of 128 already fills the MXU M dim; 256 is a good default.)
    tile_b = min(_round_up(B, 8), batch_tile_cap)
    Bp = _round_up(B, tile_b)
    if Bp != B:
        pad = ((0, Bp - B), (0, 0))
        tgt, s, c = jnp.pad(tgt, pad), jnp.pad(s, pad), jnp.pad(c, pad)

    grid = (Bp // tile_b,)

    weight_keys = ("w_all", "u_zr", "u", "cmat", "b_all")
    weight_bytes = sum(int(packed[k].size) * packed[k].dtype.itemsize
                       for k in weight_keys)
    act_bytes = 4 * tile_b * (d_model + Hp + C2 + Hp)        # f32 in/out tiles
    # weights (allow worst-case double-buffer fallback) + double-buffered acts,
    # with 2x headroom, clamped to [32 MiB, 112 MiB].
    vmem_need = 2 * weight_bytes + 2 * act_bytes
    vmem_limit = int(min(max(2 * vmem_need, 32 << 20), 112 << 20))

    kernel = functools.partial(_decoder_block_kernel, hidden_pad=Hp)

    def act_spec(feat):                  # activation tiles move with the batch index
        return pl.BlockSpec((tile_b, feat), lambda i: (i, 0))

    def run(weight_pipeline_mode):
        def resident(key):               # weights/biases: same block every grid step
            return pl.BlockSpec(packed[key].shape, lambda i: (0, 0),
                                pipeline_mode=weight_pipeline_mode)

        call = pl.pallas_call(
            kernel,
            out_shape=jax.ShapeDtypeStruct((Bp, Hp), jnp.float32),
            grid=grid,
            in_specs=[act_spec(d_model), act_spec(Hp), act_spec(C2)]
                     + [resident(k) for k in weight_keys],
            out_specs=act_spec(Hp),
            compiler_params=pltpu.CompilerParams(
                dimension_semantics=("parallel",),
                vmem_limit_bytes=vmem_limit),
        )
        return call(tgt, s, c, *(packed[k] for k in weight_keys))

    try:
        # Single-buffer the resident weights (constant index_map -> no need to
        # double-buffer; halves the weight VMEM footprint).
        out = run(pl.Buffered(1))
    except Exception:
        # TODO(synk): pl.Buffered(1) not accepted by this jax build; fall back
        # to default double-buffering (correct, just uses 2x weight VMEM).
        out = run(None)

    return out[:B, :H]


def init_params(key, hidden_size, d_model):
    """Deterministic PyTorch-Linear-style init: U(-1/sqrt(fan_in), 1/sqrt(fan_in))."""
    layers = {
        "W":   (hidden_size, d_model),
        "W_z": (hidden_size, d_model),
        "W_r": (hidden_size, d_model),
        "C":   (hidden_size, 2 * hidden_size),
        "C_z": (hidden_size, 2 * hidden_size),   # unused in forward (parity with __init__)
        "C_r": (hidden_size, 2 * hidden_size),   # unused in forward (parity with __init__)
        "U":   (hidden_size, hidden_size),
        "U_z": (hidden_size, hidden_size),
        "U_r": (hidden_size, hidden_size),
    }
    params = {}
    for name, (out_f, in_f) in layers.items():
        key, kw, kb = jax.random.split(key, 3)
        bound = 1.0 / (in_f ** 0.5)
        params[name + "_w"] = jax.random.uniform(
            kw, (out_f, in_f), jnp.float32, minval=-bound, maxval=bound)
        params[name + "_b"] = jax.random.uniform(
            kb, (out_f,), jnp.float32, minval=-bound, maxval=bound)
    return params


def decoder_block_ref(tgt, s, c, params):
    """Pure-JAX reference matching the PyTorch forward (highest matmul precision)."""
    hi = jax.lax.Precision.HIGHEST

    def lin(name, x):
        return jnp.dot(x, params[name + "_w"].T, precision=hi) + params[name + "_b"]

    z = jax.nn.sigmoid(lin("W_z", tgt) + lin("U_z", s))
    r = jax.nn.sigmoid(lin("W_r", tgt) + lin("U_r", s)) * s
    s_i = jnp.tanh(lin("W", tgt) + lin("U", r) + lin("C", c))
    return (1.0 - z) * s + z * s_i


if __name__ == "__main__":
    hidden_size = 32
    d_model = 32
    batch = 8

    key = jax.random.PRNGKey(0)
    key, k_tgt, k_s, k_c, k_p = jax.random.split(key, 5)

    tgt = jax.random.normal(k_tgt, (batch, d_model), jnp.float32)
    s = jax.random.normal(k_s, (batch, hidden_size), jnp.float32)
    c = jax.random.normal(k_c, (batch, 2 * hidden_size), jnp.float32)
    params = init_params(k_p, hidden_size, d_model)
    ref = decoder_block_ref(tgt, s, c, params)

    # f32 weight (debug) path — MXU f32 is a multi-pass bf16 decomposition, so
    # keep a tolerance-based (not bitwise) check.
    packed_f32 = prepare_decoder_params(params, matmul_dtype=jnp.float32)
    out_f32 = jax.block_until_ready(decoder_block(tgt, s, c, packed_f32))
    assert out_f32.shape == (batch, hidden_size)
    assert jnp.allclose(out_f32, ref, atol=1e-4, rtol=1e-4), "f32 mismatch vs reference"

    # Default production path: bf16 matmul operands, f32 MXU accumulation.
    packed_bf16 = prepare_decoder_params(params)
    out_bf16 = jax.block_until_ready(decoder_block(tgt, s, c, packed_bf16))
    assert jnp.allclose(out_bf16, ref, atol=2e-2, rtol=2e-2), "bf16 mismatch vs reference"

    # Odd batch exercises wrapper-side batch padding (no full-batch fallback).
    out_odd = jax.block_until_ready(decoder_block(tgt[:5], s[:5], c[:5], packed_f32))
    assert jnp.allclose(out_odd, ref[:5], atol=1e-4, rtol=1e-4), "odd-batch mismatch"

    print("KERNEL_OK")
</pallas_src>

<mosaic_0001>
module attributes {stable_mosaic.version = 11 : i64} {
  func.func @_decoder_block_kernel(%arg0: i32, %arg1: memref<8x32xf32, #tpu.memory_space<vmem>>, %arg2: memref<8x128xf32, #tpu.memory_space<vmem>>, %arg3: memref<8x64xf32, #tpu.memory_space<vmem>>, %arg4: memref<32x384xf32, #tpu.memory_space<vmem>>, %arg5: memref<128x256xf32, #tpu.memory_space<vmem>>, %arg6: memref<128x128xf32, #tpu.memory_space<vmem>>, %arg7: memref<64x128xf32, #tpu.memory_space<vmem>>, %arg8: memref<1x384xf32, #tpu.memory_space<vmem>>, %arg9: memref<8x128xf32, #tpu.memory_space<vmem>>) attributes {dimension_semantics = [#tpu.dimension_semantics<parallel>], iteration_bounds = array<i64: 1>, scalar_prefetch = 0 : i64, scratch_operands = 0 : i64, tpu.core_type = #tpu.core_type<tc>, window_params = [{transform_indices = @transform_0, window_bounds = array<i64: 8, 32>}, {transform_indices = @transform_1, window_bounds = array<i64: 8, 128>}, {transform_indices = @transform_2, window_bounds = array<i64: 8, 64>}, {pipeline_mode = #tpu.pipeline_mode<synchronous>, transform_indices = @transform_3, window_bounds = array<i64: 32, 384>}, {pipeline_mode = #tpu.pipeline_mode<synchronous>, transform_indices = @transform_4, window_bounds = array<i64: 128, 256>}, {pipeline_mode = #tpu.pipeline_mode<synchronous>, transform_indices = @transform_5, window_bounds = array<i64: 128, 128>}, {pipeline_mode = #tpu.pipeline_mode<synchronous>, transform_indices = @transform_6, window_bounds = array<i64: 64, 128>}, {pipeline_mode = #tpu.pipeline_mode<synchronous>, transform_indices = @transform_7, window_bounds = array<i64: 1, 384>}, {transform_indices = @transform_8, window_bounds = array<i64: 8, 128>}]} {
    %c0 = arith.constant 0 : index
    %c0_0 = arith.constant 0 : index
    %0 = vector.load %arg2[%c0, %c0_0] : memref<8x128xf32, #tpu.memory_space<vmem>>, vector<8x128xf32>
    %c0_1 = arith.constant 0 : index
    %c0_2 = arith.constant 0 : index
    %1 = vector.load %arg1[%c0_1, %c0_2] : memref<8x32xf32, #tpu.memory_space<vmem>>, vector<8x32xf32>
    %c0_3 = arith.constant 0 : index
    %c0_4 = arith.constant 0 : index
    %2 = vector.load %arg4[%c0_3, %c0_4] : memref<32x384xf32, #tpu.memory_space<vmem>>, vector<32x384xf32>
    %cst = arith.constant dense<0.000000e+00> : vector<8x384xf32>
    %3 = tpu.matmul %1, %2, %cst {dimension_numbers = #tpu.dot_dimension_numbers<[1], [0], [0], [1], [0, 0, 1, 1], [], []>} : vector<8x32xf32>, vector<32x384xf32>, vector<8x384xf32> -> vector<8x384xf32>
    %c0_5 = arith.constant 0 : index
    %c0_6 = arith.constant 0 : index
    %4 = vector.load %arg8[%c0_5, %c0_6] : memref<1x384xf32, #tpu.memory_space<vmem>>, vector<1x384xf32>
    %5 = vector.broadcast %4 : vector<1x384xf32> to vector<8x384xf32>
    %6 = arith.addf %3, %5 : vector<8x384xf32>
    %c0_7 = arith.constant 0 : index
    %c0_8 = arith.constant 0 : index
    %7 = vector.load %arg5[%c0_7, %c0_8] : memref<128x256xf32, #tpu.memory_space<vmem>>, vector<128x256xf32>
    %cst_9 = arith.constant dense<0.000000e+00> : vector<8x256xf32>
    %8 = tpu.matmul %0, %7, %cst_9 {dimension_numbers = #tpu.dot_dimension_numbers<[1], [0], [0], [1], [0, 0, 1, 1], [], []>} : vector<8x128xf32>, vector<128x256xf32>, vector<8x256xf32> -> vector<8x256xf32>
    %c0_10 = arith.constant 0 : index
    %c0_11 = arith.constant 0 : index
    %9 = vector.load %arg3[%c0_10, %c0_11] : memref<8x64xf32, #tpu.memory_space<vmem>>, vector<8x64xf32>
    %c0_12 = arith.constant 0 : index
    %c0_13 = arith.constant 0 : index
    %10 = vector.load %arg7[%c0_12, %c0_13] : memref<64x128xf32, #tpu.memory_space<vmem>>, vector<64x128xf32>
    %cst_14 = arith.constant dense<0.000000e+00> : vector<8x128xf32>
    %11 = tpu.matmul %9, %10, %cst_14 {dimension_numbers = #tpu.dot_dimension_numbers<[1], [0], [0], [1], [0, 0, 1, 1], [], []>} : vector<8x64xf32>, vector<64x128xf32>, vector<8x128xf32> -> vector<8x128xf32>
    %12 = vector.extract_strided_slice %6 {offsets = [0, 0], sizes = [8, 128], strides = [1, 1]} : vector<8x384xf32> to vector<8x128xf32>
    %13 = vector.extract_strided_slice %8 {offsets = [0, 0], sizes = [8, 128], strides = [1, 1]} : vector<8x256xf32> to vector<8x128xf32>
    %14 = arith.addf %12, %13 : vector<8x128xf32>
    %15 = arith.negf %14 : vector<8x128xf32>
    %16 = math.exp %15 : vector<8x128xf32>
    %cst_15 = arith.constant 1.000000e+00 : f32
    %17 = vector.broadcast %cst_15 : f32 to vector<8x128xf32>
    %18 = arith.addf %17, %16 : vector<8x128xf32>
    %19 = arith.divf %17, %18 : vector<8x128xf32>
    %20 = vector.extract_strided_slice %6 {offsets = [0, 128], sizes = [8, 128], strides = [1, 1]} : vector<8x384xf32> to vector<8x128xf32>
    %21 = vector.extract_strided_slice %8 {offsets = [0, 128], sizes = [8, 128], strides = [1, 1]} : vector<8x256xf32> to vector<8x128xf32>
    %22 = arith.addf %20, %21 : vector<8x128xf32>
    %23 = arith.negf %22 : vector<8x128xf32>
    %24 = math.exp %23 : vector<8x128xf32>
    %cst_16 = arith.constant 1.000000e+00 : f32
    %25 = vector.broadcast %cst_16 : f32 to vector<8x128xf32>
    %26 = arith.addf %25, %24 : vector<8x128xf32>
    %27 = arith.divf %25, %26 : vector<8x128xf32>
    %28 = arith.mulf %27, %0 : vector<8x128xf32>
    %c0_17 = arith.constant 0 : index
    %c0_18 = arith.constant 0 : index
    %29 = vector.load %arg6[%c0_17, %c0_18] : memref<128x128xf32, #tpu.memory_space<vmem>>, vector<128x128xf32>
    %cst_19 = arith.constant dense<0.000000e+00> : vector<8x128xf32>
    %30 = tpu.matmul %28, %29, %cst_19 {dimension_numbers = #tpu.dot_dimension_numbers<[1], [0], [0], [1], [0, 0, 1, 1], [], []>} : vector<8x128xf32>, vector<128x128xf32>, vector<8x128xf32> -> vector<8x128xf32>
    %31 = vector.extract_strided_slice %6 {offsets = [0, 256], sizes = [8, 128], strides = [1, 1]} : vector<8x384xf32> to vector<8x128xf32>
    %32 = arith.addf %31, %30 : vector<8x128xf32>
    %33 = arith.addf %32, %11 : vector<8x128xf32>
    %34 = math.tanh %33 : vector<8x128xf32>
    %cst_20 = arith.constant 1.000000e+00 : f32
    %35 = vector.broadcast %cst_20 : f32 to vector<8x128xf32>
    %36 = arith.subf %35, %19 : vector<8x128xf32>
    %37 = arith.mulf %36, %0 : vector<8x128xf32>
    %38 = arith.mulf %19, %34 : vector<8x128xf32>
    %39 = arith.addf %37, %38 : vector<8x128xf32>
    %c0_21 = arith.constant 0 : index
    %c0_22 = arith.constant 0 : index
    %40 = vector.load %arg9[%c0_21, %c0_22] : memref<8x128xf32, #tpu.memory_space<vmem>>, vector<8x128xf32>
    tpu.vector_store %arg9[%c0_21, %c0_22], %39 {strides = array<i32>} : memref<8x128xf32, #tpu.memory_space<vmem>>, vector<8x128xf32>,
    return
  }
  func.func @transform_0(%arg0: i32) -> (i32, i32) {
    %c0_i32 = arith.constant 0 : i32
    %c0_i32_0 = arith.constant 0 : i32
    return %arg0, %c0_i32 : i32, i32
  }
  func.func @transform_1(%arg0: i32) -> (i32, i32) {
    %c0_i32 = arith.constant 0 : i32
    %c0_i32_0 = arith.constant 0 : i32
    return %arg0, %c0_i32 : i32, i32
  }
  func.func @transform_2(%arg0: i32) -> (i32, i32) {
    %c0_i32 = arith.constant 0 : i32
    %c0_i32_0 = arith.constant 0 : i32
    return %arg0, %c0_i32 : i32, i32
  }
  func.func @transform_3(%arg0: i32) -> (i32, i32) {
    %c0_i32 = arith.constant 0 : i32
    %c0_i32_0 = arith.constant 0 : i32
    %c0_i32_1 = arith.constant 0 : i32
    return %c0_i32, %c0_i32_0 : i32, i32
  }
  func.func @transform_4(%arg0: i32) -> (i32, i32) {
    %c0_i32 = arith.constant 0 : i32
    %c0_i32_0 = arith.constant 0 : i32
    %c0_i32_1 = arith.constant 0 : i32
    return %c0_i32, %c0_i32_0 : i32, i32
  }
  func.func @transform_5(%arg0: i32) -> (i32, i32) {
    %c0_i32 = arith.constant 0 : i32
    %c0_i32_0 = arith.constant 0 : i32
    %c0_i32_1 = arith.constant 0 : i32
    return %c0_i32, %c0_i32_0 : i32, i32
  }
  func.func @transform_6(%arg0: i32) -> (i32, i32) {
    %c0_i32 = arith.constant 0 : i32
    %c0_i32_0 = arith.constant 0 : i32
    %c0_i32_1 = arith.constant 0 : i32
    return %c0_i32, %c0_i32_0 : i32, i32
  }
  func.func @transform_7(%arg0: i32) -> (i32, i32) {
    %c0_i32 = arith.constant 0 : i32
    %c0_i32_0 = arith.constant 0 : i32
    %c0_i32_1 = arith.constant 0 : i32
    return %c0_i32, %c0_i32_0 : i32, i32
  }
  func.func @transform_8(%arg0: i32) -> (i32, i32) {
    %c0_i32 = arith.constant 0 : i32
    %c0_i32_0 = arith.constant 0 : i32
    return %arg0, %c0_i32 : i32, i32
  }
}

module attributes {stable_mosaic.version = 11 : i64} {
  func.func @_decoder_block_kernel(%arg0: i32, %arg1: memref<8x32xf32, #tpu.memory_space<vmem>>, %arg2: memref<8x128xf32, #tpu.memory_space<vmem>>, %arg3: memref<8x64xf32, #tpu.memory_space<vmem>>, %arg4: memref<32x384xf32, #tpu.memory_space<vmem>>, %arg5: memref<128x256xf32, #tpu.memory_space<vmem>>, %arg6: memref<128x128xf32, #tpu.memory_space<vmem>>, %arg7: memref<64x128xf32, #tpu.memory_space<vmem>>, %arg8: memref<1x384xf32, #tpu.memory_space<vmem>>, %arg9: memref<8x128xf32, #tpu.memory_space<vmem>>) attributes {dimension_semantics = [#tpu.dimension_semantics<parallel>], iteration_bounds = array<i64: 1>, scalar_prefetch = 0 : i64, scratch_operands = 0 : i64, tpu.core_type = #tpu.core_type<tc>, window_params = [{transform_indices = @transform_0, window_bounds = array<i64: 8, 32>}, {transform_indices = @transform_1, window_bounds = array<i64: 8, 128>}, {transform_indices = @transform_2, window_bounds = array<i64: 8, 64>}, {pipeline_mode = #tpu.pipeline_mode<synchronous>, transform_indices = @transform_3, window_bounds = array<i64: 32, 384>}, {pipeline_mode = #tpu.pipeline_mode<synchronous>, transform_indices = @transform_4, window_bounds = array<i64: 128, 256>}, {pipeline_mode = #tpu.pipeline_mode<synchronous>, transform_indices = @transform_5, window_bounds = array<i64: 128, 128>}, {pipeline_mode = #tpu.pipeline_mode<synchronous>, transform_indices = @transform_6, window_bounds = array<i64: 64, 128>}, {pipeline_mode = #tpu.pipeline_mode<synchronous>, transform_indices = @transform_7, window_bounds = array<i64: 1, 384>}, {transform_indices = @transform_8, window_bounds = array<i64: 8, 128>}]} {
    %c0 = arith.constant 0 : index
    %c0_0 = arith.constant 0 : index
    %0 = vector.load %arg2[%c0, %c0_0] : memref<8x128xf32, #tpu.memory_space<vmem>>, vector<8x128xf32>
    %c0_1 = arith.constant 0 : index
    %c0_2 = arith.constant 0 : index
    %1 = vector.load %arg1[%c0_1, %c0_2] : memref<8x32xf32, #tpu.memory_space<vmem>>, vector<8x32xf32>
    %c0_3 = arith.constant 0 : index
    %c0_4 = arith.constant 0 : index
    %2 = vector.load %arg4[%c0_3, %c0_4] : memref<32x384xf32, #tpu.memory_space<vmem>>, vector<32x384xf32>
    %cst = arith.constant dense<0.000000e+00> : vector<8x384xf32>
    %3 = tpu.matmul %1, %2, %cst {dimension_numbers = #tpu.dot_dimension_numbers<[1], [0], [0], [1], [0, 0, 1, 1], [], []>} : vector<8x32xf32>, vector<32x384xf32>, vector<8x384xf32> -> vector<8x384xf32>
    %c0_5 = arith.constant 0 : index
    %c0_6 = arith.constant 0 : index
    %4 = vector.load %arg8[%c0_5, %c0_6] : memref<1x384xf32, #tpu.memory_space<vmem>>, vector<1x384xf32>
    %5 = vector.broadcast %4 : vector<1x384xf32> to vector<8x384xf32>
    %6 = arith.addf %3, %5 : vector<8x384xf32>
    %c0_7 = arith.constant 0 : index
    %c0_8 = arith.constant 0 : index
    %7 = vector.load %arg5[%c0_7, %c0_8] : memref<128x256xf32, #tpu.memory_space<vmem>>, vector<128x256xf32>
    %cst_9 = arith.constant dense<0.000000e+00> : vector<8x256xf32>
    %8 = tpu.matmul %0, %7, %cst_9 {dimension_numbers = #tpu.dot_dimension_numbers<[1], [0], [0], [1], [0, 0, 1, 1], [], []>} : vector<8x128xf32>, vector<128x256xf32>, vector<8x256xf32> -> vector<8x256xf32>
    %c0_10 = arith.constant 0 : index
    %c0_11 = arith.constant 0 : index
    %9 = vector.load %arg3[%c0_10, %c0_11] : memref<8x64xf32, #tpu.memory_space<vmem>>, vector<8x64xf32>
    %c0_12 = arith.constant 0 : index
    %c0_13 = arith.constant 0 : index
    %10 = vector.load %arg7[%c0_12, %c0_13] : memref<64x128xf32, #tpu.memory_space<vmem>>, vector<64x128xf32>
    %cst_14 = arith.constant dense<0.000000e+00> : vector<8x128xf32>
    %11 = tpu.matmul %9, %10, %cst_14 {dimension_numbers = #tpu.dot_dimension_numbers<[1], [0], [0], [1], [0, 0, 1, 1], [], []>} : vector<8x64xf32>, vector<64x128xf32>, vector<8x128xf32> -> vector<8x128xf32>
    %12 = vector.extract_strided_slice %6 {offsets = [0, 0], sizes = [8, 128], strides = [1, 1]} : vector<8x384xf32> to vector<8x128xf32>
    %13 = vector.extract_strided_slice %8 {offsets = [0, 0], sizes = [8, 128], strides = [1, 1]} : vector<8x256xf32> to vector<8x128xf32>
    %14 = arith.addf %12, %13 : vector<8x128xf32>
    %15 = arith.negf %14 : vector<8x128xf32>
    %16 = math.exp %15 : vector<8x128xf32>
    %cst_15 = arith.constant 1.000000e+00 : f32
    %17 = vector.broadcast %cst_15 : f32 to vector<8x128xf32>
    %18 = arith.addf %17, %16 : vector<8x128xf32>
    %19 = arith.divf %17, %18 : vector<8x128xf32>
    %20 = vector.extract_strided_slice %6 {offsets = [0, 128], sizes = [8, 128], strides = [1, 1]} : vector<8x384xf32> to vector<8x128xf32>
    %21 = vector.extract_strided_slice %8 {offsets = [0, 128], sizes = [8, 128], strides = [1, 1]} : vector<8x256xf32> to vector<8x128xf32>
    %22 = arith.addf %20, %21 : vector<8x128xf32>
    %23 = arith.negf %22 : vector<8x128xf32>
    %24 = math.exp %23 : vector<8x128xf32>
    %cst_16 = arith.constant 1.000000e+00 : f32
    %25 = vector.broadcast %cst_16 : f32 to vector<8x128xf32>
    %26 = arith.addf %25, %24 : vector<8x128xf32>
    %27 = arith.divf %25, %26 : vector<8x128xf32>
    %28 = arith.mulf %27, %0 : vector<8x128xf32>
    %c0_17 = arith.constant 0 : index
    %c0_18 = arith.constant 0 : index
    %29 = vector.load %arg6[%c0_17, %c0_18] : memref<128x128xf32, #tpu.memory_space<vmem>>, vector<128x128xf32>
    %cst_19 = arith.constant dense<0.000000e+00> : vector<8x128xf32>
    %30 = tpu.matmul %28, %29, %cst_19 {dimension_numbers = #tpu.dot_dimension_numbers<[1], [0], [0], [1], [0, 0, 1, 1], [], []>} : vector<8x128xf32>, vector<128x128xf32>, vector<8x128xf32> -> vector<8x128xf32>
    %31 = vector.extract_strided_slice %6 {offsets = [0, 256], sizes = [8, 128], strides = [1, 1]} : vector<8x384xf32> to vector<8x128xf32>
    %32 = arith.addf %31, %30 : vector<8x128xf32>
    %33 = arith.addf %32, %11 : vector<8x128xf32>
    %34 = math.tanh %33 : vector<8x128xf32>
    %cst_20 = arith.constant 1.000000e+00 : f32
    %35 = vector.broadcast %cst_20 : f32 to vector<8x128xf32>
    %36 = arith.subf %35, %19 : vector<8x128xf32>
    %37 = arith.mulf %36, %0 : vector<8x128xf32>
    %38 = arith.mulf %19, %34 : vector<8x128xf32>
    %39 = arith.addf %37, %38 : vector<8x128xf32>
    %c0_21 = arith.constant 0 : index
    %c0_22 = arith.constant 0 : index
    %40 = vector.load %arg9[%c0_21, %c0_22] : memref<8x128xf32, #tpu.memory_space<vmem>>, vector<8x128xf32>
    tpu.vector_store %arg9[%c0_21, %c0_22], %39 {strides = array<i32>} : memref<8x128xf32, #tpu.memory_space<vmem>>, vector<8x128xf32>,
    return
  }
  func.func @transform_0(%arg0: i32) -> (i32, i32) {
    %c0_i32 = arith.constant 0 : i32
    %c0_i32_0 = arith.constant 0 : i32
    return %arg0, %c0_i32 : i32, i32
  }
  func.func @transform_1(%arg0: i32) -> (i32, i32) {
    %c0_i32 = arith.constant 0 : i32
    %c0_i32_0 = arith.constant 0 : i32
    return %arg0, %c0_i32 : i32, i32
  }
  func.func @transform_2(%arg0: i32) -> (i32, i32) {
    %c0_i32 = arith.constant 0 : i32
    %c0_i32_0 = arith.constant 0 : i32
    return %arg0, %c0_i32 : i32, i32
  }
  func.func @transform_3(%arg0: i32) -> (i32, i32) {
    %c0_i32 = arith.constant 0 : i32
    %c0_i32_0 = arith.constant 0 : i32
    %c0_i32_1 = arith.constant 0 : i32
    return %c0_i32, %c0_i32_0 : i32, i32
  }
  func.func @transform_4(%arg0: i32) -> (i32, i32) {
    %c0_i32 = arith.constant 0 : i32
    %c0_i32_0 = arith.constant 0 : i32
    %c0_i32_1 = arith.constant 0 : i32
    return %c0_i32, %c0_i32_0 : i32, i32
  }
  func.func @transform_5(%arg0: i32) -> (i32, i32) {
    %c0_i32 = arith.constant 0 : i32
    %c0_i32_0 = arith.constant 0 : i32
    %c0_i32_1 = arith.constant 0 : i32
    return %c0_i32, %c0_i32_0 : i32, i32
  }
  func.func @transform_6(%arg0: i32) -> (i32, i32) {
    %c0_i32 = arith.constant 0 : i32
    %c0_i32_0 = arith.constant 0 : i32
    %c0_i32_1 = arith.constant 0 : i32
    return %c0_i32, %c0_i32_0 : i32, i32
  }
  func.func @transform_7(%arg0: i32) -> (i32, i32) {
    %c0_i32 = arith.constant 0 : i32
    %c0_i32_0 = arith.constant 0 : i32
    %c0_i32_1 = arith.constant 0 : i32
    return %c0_i32, %c0_i32_0 : i32, i32
  }
  func.func @transform_8(%arg0: i32) -> (i32, i32) {
    %c0_i32 = arith.constant 0 : i32
    %c0_i32_0 = arith.constant 0 : i32
    return %arg0, %c0_i32 : i32, i32
  }
}

</mosaic_0001>

<llo_original>
// kernel: tpu_custom_call.1
$region0: #{tpu_custom_call.1}
  #allocation0 [shape = 'u32[]', space=smem, size = 0x4, offset = 0x4, fixed_abs, tag = 'smem constant byte address 0x4 - core index']
  #allocation1 [shape = 'u32[144,128]{1,0:T(1,128)}', space=vmem, size = 0x12000, scoped, tag = 'internal scratch']
  %s0 = inlined_call_operand.hbm [shape: f32[8,32], index: 0, kind: input, shape index: {}]
  %s1 = inlined_call_operand.hbm [shape: f32[8,128], index: 1, kind: input, shape index: {}]
  %s2 = inlined_call_operand.hbm [shape: f32[8,64], index: 2, kind: input, shape index: {}]
  %s3 = inlined_call_operand.hbm [shape: f32[32,384], index: 3, kind: input, shape index: {}]
  %s4 = inlined_call_operand.hbm [shape: f32[128,256], index: 4, kind: input, shape index: {}]
  %s5 = inlined_call_operand.hbm [shape: f32[128,128], index: 5, kind: input, shape index: {}]
  %s6 = inlined_call_operand.hbm [shape: f32[64,128], index: 6, kind: input, shape index: {}]
  %s7 = inlined_call_operand.vmem [shape: f32[1,384], index: 7, kind: input, shape index: {}]
  %s8 = inlined_call_operand.hbm [shape: f32[8,128], index: 8, kind: output, shape index: {}]
  %s9 = sld [smem:[#allocation0]]
  $region70: #{tpu_custom_call.1} parent=0
    _
  %s11 = ssub.s32 1, %s9
  %s12 = scalar_select 0, %s11, %s9
  $region1: #{tpu_custom_call.1} parent=0
    #allocation2 [shape = 'u8[4096]{0}', space=vmem, size = 0x1000, scoped, tag = 'input window, operand 0, single buffered']
    #allocation3 [shape = 's32[1]{0}', space=sflag, size = 0x4, scoped, tag = 'scoped memory for tpu_custom_call.1']
    #allocation4 [shape = 's32[1]{0}', space=sflag, size = 0x4, scoped, tag = 'scoped memory for tpu_custom_call.1']
    #allocation5 [shape = 'u8[4096]{0}', space=vmem, size = 0x1000, scoped, tag = 'input window, operand 1, single buffered']
    #allocation6 [shape = 's32[1]{0}', space=sflag, size = 0x4, scoped, tag = 'scoped memory for tpu_custom_call.1']
    #allocation7 [shape = 'u8[4096]{0}', space=vmem, size = 0x1000, scoped, tag = 'input window, operand 2, single buffered']
    #allocation8 [shape = 'u8[49152]{0}', space=vmem, size = 0xc000, scoped, tag = 'input window, operand 3, single buffered']
    #allocation9 [shape = 's32[1]{0}', space=sflag, size = 0x4, scoped, tag = 'scoped memory for tpu_custom_call.1']
    #allocation10 [shape = 'u8[131072]{0}', space=vmem, size = 0x20000, scoped, tag = 'input window, operand 4, single buffered']
    #allocation11 [shape = 'u8[65536]{0}', space=vmem, size = 0x10000, scoped, tag = 'input window, operand 5, single buffered']
    #allocation12 [shape = 's32[1]{0}', space=sflag, size = 0x4, scoped, tag = 'scoped memory for tpu_custom_call.1']
    #allocation13 [shape = 'u8[32768]{0}', space=vmem, size = 0x8000, scoped, tag = 'input window, operand 6, single buffered']
    #allocation14 [shape = 'u8[4096]{0}', space=vmem, size = 0x1000, scoped, tag = 'output window, operand 0, single buffered']
    %13 = vsyncpa [#allocation3], 0
    %14 = vsyncpa [#allocation6], 0
    %15 = vsyncpa [#allocation9], 0
    %16 = vsyncpa [#allocation12], 0
    %17 = vsyncpa [#allocation4], 0
    // Predicated region
    $region2: #{tpu_custom_call.1} parent=1 // pred_check
      _
    $region3: #{tpu_custom_call.1} parent=1 // pred_check_branch
      %19 = sbr.rel (0) target = $region5
    $region4: #{tpu_custom_call.1} parent=1 // pred_region
      %s21 = ssub.s32 128, 128
      %22 = vsyncadd [#allocation3], %s21
      %s24 = sshll.u32 [#allocation2], 4
      %s25 = int_to_ptr.vmem [resolvable:$true] %s24
      %27 = dma.hbm_to_vmem [thread:$0]  %s0, 128, %s25, [#allocation3]
    $region5: #{tpu_custom_call.1} parent=1 // pred_fallthru
      _
    // Predicated region
    $region6: #{tpu_custom_call.1} parent=1 // pred_check
      _
    $region7: #{tpu_custom_call.1} parent=1 // pred_check_branch
      %29 = sbr.rel (0) target = $region9
    $region8: #{tpu_custom_call.1} parent=1 // pred_region
      %s31 = ssub.s32 128, 128
      %32 = vsyncadd [#allocation6], %s31
      %s34 = sshll.u32 [#allocation5], 4
      %s35 = int_to_ptr.vmem [resolvable:$true] %s34
      %37 = dma.hbm_to_vmem [thread:$0]  %s1, 128, %s35, [#allocation6]
    $region9: #{tpu_custom_call.1} parent=1 // pred_fallthru
      _
    // Predicated region
    $region10: #{tpu_custom_call.1} parent=1 // pred_check
      _
    $region11: #{tpu_custom_call.1} parent=1 // pred_check_branch
      %39 = sbr.rel (0) target = $region13
    $region12: #{tpu_custom_call.1} parent=1 // pred_region
      %s41 = ssub.s32 128, 128
      %42 = vsyncadd [#allocation6], %s41
      %s44 = sshll.u32 [#allocation7], 4
      %s45 = int_to_ptr.vmem [resolvable:$true] %s44
      %47 = dma.hbm_to_vmem [thread:$0]  %s2, 128, %s45, [#allocation6]
    $region13: #{tpu_custom_call.1} parent=1 // pred_fallthru
      _
    // Predicated region
    $region14: #{tpu_custom_call.1} parent=1 // pred_check
      _
    $region15: #{tpu_custom_call.1} parent=1 // pred_check_branch
      %49 = sbr.rel (0) target = $region17
    $region16: #{tpu_custom_call.1} parent=1 // pred_region
      %s51 = ssub.s32 1536, 1536
      %52 = vsyncadd [#allocation9], %s51
      %s53 = sshll.u32 [#allocation8], 4
      %s54 = int_to_ptr.vmem [resolvable:$true] %s53
      %59 = dma.hbm_to_vmem [thread:$0]  %s3, 1536, %s54, [#allocation9], 384, 384, 24
    $region17: #{tpu_custom_call.1} parent=1 // pred_fallthru
      _
    // Predicated region
    $region18: #{tpu_custom_call.1} parent=1 // pred_check
      _
    $region19: #{tpu_custom_call.1} parent=1 // pred_check_branch
      %61 = sbr.rel (0) target = $region21
    $region20: #{tpu_custom_call.1} parent=1 // pred_region
      %s63 = ssub.s32 4096, 4096
      %64 = vsyncadd [#allocation9], %s63
      %s65 = sshll.u32 [#allocation10], 4
      %s66 = int_to_ptr.vmem [resolvable:$true] %s65
      %71 = dma.hbm_to_vmem [thread:$0]  %s4, 4096, %s66, [#allocation9], 256, 256, 16
    $region21: #{tpu_custom_call.1} parent=1 // pred_fallthru
      _
    // Predicated region
    $region22: #{tpu_custom_call.1} parent=1 // pred_check
      _
    $region23: #{tpu_custom_call.1} parent=1 // pred_check_branch
      %73 = sbr.rel (0) target = $region25
    $region24: #{tpu_custom_call.1} parent=1 // pred_region
      %s75 = ssub.s32 2048, 2048
      %76 = vsyncadd [#allocation12], %s75
      %s77 = sshll.u32 [#allocation11], 4
      %s78 = int_to_ptr.vmem [resolvable:$true] %s77
      %83 = dma.hbm_to_vmem [thread:$0]  %s5, 2048, %s78, [#allocation12], 128, 128, 8
    $region25: #{tpu_custom_call.1} parent=1 // pred_fallthru
      _
    // Predicated region
    $region26: #{tpu_custom_call.1} parent=1 // pred_check
      _
    $region27: #{tpu_custom_call.1} parent=1 // pred_check_branch
      %85 = sbr.rel (0) target = $region29
    $region28: #{tpu_custom_call.1} parent=1 // pred_region
      %s87 = ssub.s32 1024, 1024
      %88 = vsyncadd [#allocation12], %s87
      %s89 = sshll.u32 [#allocation13], 4
      %s90 = int_to_ptr.vmem [resolvable:$true] %s89
      %95 = dma.hbm_to_vmem [thread:$0]  %s6, 1024, %s90, [#allocation12], 128, 128, 8
    $region29: #{tpu_custom_call.1} parent=1 // pred_fallthru
      _
    // Predicated region
    $region30: #{tpu_custom_call.1} parent=1 // pred_check
      _
    $region31: #{tpu_custom_call.1} parent=1 // pred_check_branch
      %97 = sbr.rel (0) target = $region33
    $region32: #{tpu_custom_call.1} parent=1 // pred_region
      _
    $region33: #{tpu_custom_call.1} parent=1 // pred_fallthru
      _
    // Predicated region
    $region34: #{tpu_custom_call.1} parent=1 // pred_check
      _
    $region35: #{tpu_custom_call.1} parent=1 // pred_check_branch
      %99 = sbr.rel (0) target = $region37
    $region36: #{tpu_custom_call.1} parent=1 // pred_region
      %100 = dma.done [#allocation3], 128
    $region37: #{tpu_custom_call.1} parent=1 // pred_fallthru
      _
    // Predicated region
    $region38: #{tpu_custom_call.1} parent=1 // pred_check
      _
    $region39: #{tpu_custom_call.1} parent=1 // pred_check_branch
      %102 = sbr.rel (0) target = $region41
    $region40: #{tpu_custom_call.1} parent=1 // pred_region
      %103 = dma.done [#allocation6], 128
    $region41: #{tpu_custom_call.1} parent=1 // pred_fallthru
      _
    // Predicated region
    $region42: #{tpu_custom_call.1} parent=1 // pred_check
      _
    $region43: #{tpu_custom_call.1} parent=1 // pred_check_branch
      %105 = sbr.rel (0) target = $region45
    $region44: #{tpu_custom_call.1} parent=1 // pred_region
      %106 = dma.done [#allocation6], 128
    $region45: #{tpu_custom_call.1} parent=1 // pred_fallthru
      _
    // Predicated region
    $region46: #{tpu_custom_call.1} parent=1 // pred_check
      _
    $region47: #{tpu_custom_call.1} parent=1 // pred_check_branch
      %108 = sbr.rel (0) target = $region49
    $region48: #{tpu_custom_call.1} parent=1 // pred_region
      %109 = dma.done [#allocation9], 1536
    $region49: #{tpu_custom_call.1} parent=1 // pred_fallthru
      _
    // Predicated region
    $region50: #{tpu_custom_call.1} parent=1 // pred_check
      _
    $region51: #{tpu_custom_call.1} parent=1 // pred_check_branch
      %111 = sbr.rel (0) target = $region53
    $region52: #{tpu_custom_call.1} parent=1 // pred_region
      %112 = dma.done [#allocation9], 4096
    $region53: #{tpu_custom_call.1} parent=1 // pred_fallthru
      _
    // Predicated region
    $region54: #{tpu_custom_call.1} parent=1 // pred_check
      _
    $region55: #{tpu_custom_call.1} parent=1 // pred_check_branch
      %114 = sbr.rel (0) target = $region57
    $region56: #{tpu_custom_call.1} parent=1 // pred_region
      %115 = dma.done [#allocation12], 2048
    $region57: #{tpu_custom_call.1} parent=1 // pred_fallthru
      _
    // Predicated region
    $region58: #{tpu_custom_call.1} parent=1 // pred_check
      _
    $region59: #{tpu_custom_call.1} parent=1 // pred_check_branch
      %117 = sbr.rel (0) target = $region61
    $region60: #{tpu_custom_call.1} parent=1 // pred_region
      %118 = dma.done [#allocation12], 1024
    $region61: #{tpu_custom_call.1} parent=1 // pred_fallthru
      _
    %v119 = vld [vmem:[#allocation5] sm:$0xff]
    %v120 = vld [vmem:[#allocation2] sm:$0xff]
    %v121 = vld [vmem:[#allocation8] sm:$0xff]
    %v122 = vld [vmem:[#allocation8 + $0x8] sm:$0xff]
    %v123 = vld [vmem:[#allocation8 + $0x10] sm:$0xff]
    %v124 = vld [vmem:[#allocation8 + $0x18] sm:$0xff]
    %v125 = vld [vmem:[#allocation8 + $0x20] sm:$0xff]
    %v126 = vld [vmem:[#allocation8 + $0x28] sm:$0xff]
    %v127 = vld [vmem:[#allocation8 + $0x30] sm:$0xff]
    %v128 = vld [vmem:[#allocation8 + $0x38] sm:$0xff]
    %v129 = vld [vmem:[#allocation8 + $0x40] sm:$0xff]
    %v130 = vld [vmem:[#allocation8 + $0x48] sm:$0xff]
    %v131 = vld [vmem:[#allocation8 + $0x50] sm:$0xff]
    %v132 = vld [vmem:[#allocation8 + $0x58] sm:$0xff]
    %v133 = vld [vmem:[%s7] sm:$0x7]
    %v135 = vlaneseq
    %v136 = vshrl.u32 %v135, 7
    %v137 = vsub.s32 0, %v136
    %v138 = vrot.slane %v133, %v137
    %v139 = vlaneseq
    %v140 = vshrl.u32 %v139, 7
    %v141 = vsub.s32 1, %v140
    %v142 = vrot.slane %v133, %v141
    %v143 = vlaneseq
    %v144 = vshrl.u32 %v143, 7
    %v145 = vsub.s32 2, %v144
    %v146 = vrot.slane %v133, %v145
    %vm150 = vcmask 261120
    %v152 = vsel %vm150, %v120, 0
    %154 = vmatprep.subr.mxu0 %v122
    %155 = vmatpush1.msra.mxu0 %v121
    %156 = vmatprep.subr.mxu0 %v125
    %157 = vmatpush1.msra.mxu0 %v124
    %158 = vmatprep.subr.mxu0 %v128
    %159 = vmatpush1.msra.mxu0 %v127
    %160 = vmatprep.subr.mxu0 %v131
    %161 = vmatpush1.msra.mxu0 %v130
    %162 = vmatprep.subr.mxu0 0.0
    %163 = vmatpush1.msra.mxu0 0.0
    %164 = vmatprep.subr.mxu0 0.0
    %165 = vmatpush1.msra.mxu0 0.0
    %166 = vmatprep.subr.mxu0 0.0
    %167 = vmatpush1.msra.mxu0 0.0
    %168 = vmatprep.subr.mxu0 0.0
    %169 = vmatpush1.msra.mxu0 0.0
    %170 = vmatprep.subr.mxu0 0.0
    %171 = vmatpush1.msra.mxu0 0.0
    %172 = vmatprep.subr.mxu0 0.0
    %173 = vmatpush1.msra.mxu0 0.0
    %174 = vmatprep.subr.mxu0 0.0
    %175 = vmatpush1.msra.mxu0 0.0
    %176 = vmatprep.subr.mxu0 0.0
    %177 = vmatpush1.msra.mxu0 0.0
    %178 = vmatprep.subr.mxu0 0.0
    %179 = vmatpush1.msra.mxu0 0.0
    %180 = vmatprep.subr.mxu0 0.0
    %181 = vmatpush1.msra.mxu0 0.0
    %182 = vmatprep.subr.mxu0 0.0
    %183 = vmatpush1.msra.mxu0 0.0
    %184 = vmatprep.subr.mxu0 0.0
    %185 = vmatpush1.msra.mxu0 0.0
    %186 = vmatprep.subr.mxu0 0.0
    %187 = vmatpush1.msra.mxu0 0.0
    %188 = vmatprep.subr.mxu0 0.0
    %189 = vmatpush1.msra.mxu0 0.0
    %190 = vmatprep.subr.mxu0 0.0
    %191 = vmatpush1.msra.mxu0 0.0
    %192 = vmatprep.subr.mxu0 0.0
    %193 = vmatpush1.msra.mxu0 0.0
    %194 = vmatprep.subr.mxu0 0.0
    %195 = vmatpush1.msra.mxu0 0.0
    %196 = vmatprep.subr.mxu0 0.0
    %197 = vmatpush1.msra.mxu0 0.0
    %198 = vmatprep.subr.mxu0 0.0
    %199 = vmatpush1.msra.mxu0 0.0
    %200 = vmatprep.subr.mxu0 0.0
    %201 = vmatpush1.msra.mxu0 0.0
    %202 = vmatprep.subr.mxu0 0.0
    %203 = vmatpush1.msra.mxu0 0.0
    %204 = vmatprep.subr.mxu0 0.0
    %205 = vmatpush1.msra.mxu0 0.0
    %206 = vmatprep.subr.mxu0 0.0
    %207 = vmatpush1.msra.mxu0 0.0
    %208 = vmatprep.subr.mxu0 0.0
    %209 = vmatpush1.msra.mxu0 0.0
    %210 = vmatprep.subr.mxu0 0.0
    %211 = vmatpush1.msra.mxu0 0.0
    %212 = vmatprep.subr.mxu0 0.0
    %213 = vmatpush1.msra.mxu0 0.0
    %214 = vmatprep.subr.mxu0 0.0
    %215 = vmatpush1.msra.mxu0 0.0
    %216 = vmatprep.subr.mxu0 0.0
    %217 = vmatpush1.msra.mxu0 0.0
    %218 = vmatprep.mubr.f32.mxu0 0.0
    %219 = vmatmul.mubr.f32.gmra.mrb[0].mxu0 %v152
    %v220 = vpop.f32.mrb[0].mxu0
    %v221 = vadd.f32 %v138, %v220
    %v222 = vpop.f32.mrb[0].mxu0
    %v223 = vadd.f32 %v142, %v222
    %224 = vdwg.mxu0
    %225 = vmatprep.subr.mxu0 0.0
    %226 = vmatpush1.msra.mxu0 %v123
    %227 = vmatprep.subr.mxu0 0.0
    %228 = vmatpush1.msra.mxu0 %v126
    %229 = vmatprep.subr.mxu0 0.0
    %230 = vmatpush1.msra.mxu0 %v129
    %231 = vmatprep.subr.mxu0 0.0
    %232 = vmatpush1.msra.mxu0 %v132
    %233 = vmatprep.subr.mxu0 0.0
    %234 = vmatpush1.msra.mxu0 0.0
    %235 = vmatprep.subr.mxu0 0.0
    %236 = vmatpush1.msra.mxu0 0.0
    %237 = vmatprep.subr.mxu0 0.0
    %238 = vmatpush1.msra.mxu0 0.0
    %239 = vmatprep.subr.mxu0 0.0
    %240 = vmatpush1.msra.mxu0 0.0
    %241 = vmatprep.subr.mxu0 0.0
    %242 = vmatpush1.msra.mxu0 0.0
    %243 = vmatprep.subr.mxu0 0.0
    %244 = vmatpush1.msra.mxu0 0.0
    %245 = vmatprep.subr.mxu0 0.0
    %246 = vmatpush1.msra.mxu0 0.0
    %247 = vmatprep.subr.mxu0 0.0
    %248 = vmatpush1.msra.mxu0 0.0
    %249 = vmatprep.subr.mxu0 0.0
    %250 = vmatpush1.msra.mxu0 0.0
    %251 = vmatprep.subr.mxu0 0.0
    %252 = vmatpush1.msra.mxu0 0.0
    %253 = vmatprep.subr.mxu0 0.0
    %254 = vmatpush1.msra.mxu0 0.0
    %255 = vmatprep.subr.mxu0 0.0
    %256 = vmatpush1.msra.mxu0 0.0
    %257 = vmatprep.subr.mxu0 0.0
    %258 = vmatpush1.msra.mxu0 0.0
    %259 = vmatprep.subr.mxu0 0.0
    %260 = vmatpush1.msra.mxu0 0.0
    %261 = vmatprep.subr.mxu0 0.0
    %262 = vmatpush1.msra.mxu0 0.0
    %263 = vmatprep.subr.mxu0 0.0
    %264 = vmatpush1.msra.mxu0 0.0
    %265 = vmatprep.subr.mxu0 0.0
    %266 = vmatpush1.msra.mxu0 0.0
    %267 = vmatprep.subr.mxu0 0.0
    %268 = vmatpush1.msra.mxu0 0.0
    %269 = vmatprep.subr.mxu0 0.0
    %270 = vmatpush1.msra.mxu0 0.0
    %271 = vmatprep.subr.mxu0 0.0
    %272 = vmatpush1.msra.mxu0 0.0
    %273 = vmatprep.subr.mxu0 0.0
    %274 = vmatpush1.msra.mxu0 0.0
    %275 = vmatprep.subr.mxu0 0.0
    %276 = vmatpush1.msra.mxu0 0.0
    %277 = vmatprep.subr.mxu0 0.0
    %278 = vmatpush1.msra.mxu0 0.0
    %279 = vmatprep.subr.mxu0 0.0
    %280 = vmatpush1.msra.mxu0 0.0
    %281 = vmatprep.subr.mxu0 0.0
    %282 = vmatpush1.msra.mxu0 0.0
    %283 = vmatprep.subr.mxu0 0.0
    %284 = vmatpush1.msra.mxu0 0.0
    %285 = vmatprep.subr.mxu0 0.0
    %286 = vmatpush1.msra.mxu0 0.0
    %287 = vmatprep.subr.mxu0 0.0
    %288 = vmatpush1.msra.mxu0 0.0
    %289 = vmatprep.mubr.f32.mxu0 0.0
    %290 = vmatmul.mubr.f32.gmra.mrb[0].mxu0 %v152
    %v291 = vpop.f32.mrb[0].mxu0
    %v292 = vadd.f32 %v146, %v291
    %v293 = vpop.f32.mrb[0].mxu0
    %294 = vdwg.mxu0
    %v295 = vld [vmem:[#allocation10] sm:$0xff]
    %v296 = vld [vmem:[#allocation10 + $0x8] sm:$0xff]
    %v297 = vld [vmem:[#allocation10 + $0x10] sm:$0xff]
    %v298 = vld [vmem:[#allocation10 + $0x18] sm:$0xff]
    %v299 = vld [vmem:[#allocation10 + $0x20] sm:$0xff]
    %v300 = vld [vmem:[#allocation10 + $0x28] sm:$0xff]
    %v301 = vld [vmem:[#allocation10 + $0x30] sm:$0xff]
    %v302 = vld [vmem:[#allocation10 + $0x38] sm:$0xff]
    %v303 = vld [vmem:[#allocation10 + $0x40] sm:$0xff]
    %v304 = vld [vmem:[#allocation10 + $0x48] sm:$0xff]
    %v305 = vld [vmem:[#allocation10 + $0x50] sm:$0xff]
    %v306 = vld [vmem:[#allocation10 + $0x58] sm:$0xff]
    %v307 = vld [vmem:[#allocation10 + $0x60] sm:$0xff]
    %v308 = vld [vmem:[#allocation10 + $0x68] sm:$0xff]
    %v309 = vld [vmem:[#allocation10 + $0x70] sm:$0xff]
    %v310 = vld [vmem:[#allocation10 + $0x78] sm:$0xff]
    %v311 = vld [vmem:[#allocation10 + $0x80] sm:$0xff]
    %v312 = vld [vmem:[#allocation10 + $0x88] sm:$0xff]
    %v313 = vld [vmem:[#allocation10 + $0x90] sm:$0xff]
    %v314 = vld [vmem:[#allocation10 + $0x98] sm:$0xff]
    %v315 = vld [vmem:[#allocation10 + $0xa0] sm:$0xff]
    %v316 = vld [vmem:[#allocation10 + $0xa8] sm:$0xff]
    %v317 = vld [vmem:[#allocation10 + $0xb0] sm:$0xff]
    %v318 = vld [vmem:[#allocation10 + $0xb8] sm:$0xff]
    %v319 = vld [vmem:[#allocation10 + $0xc0] sm:$0xff]
    %v320 = vld [vmem:[#allocation10 + $0xc8] sm:$0xff]
    %v321 = vld [vmem:[#allocation10 + $0xd0] sm:$0xff]
    %v322 = vld [vmem:[#allocation10 + $0xd8] sm:$0xff]
    %v323 = vld [vmem:[#allocation10 + $0xe0] sm:$0xff]
    %v324 = vld [vmem:[#allocation10 + $0xe8] sm:$0xff]
    %v325 = vld [vmem:[#allocation10 + $0xf0] sm:$0xff]
    %v326 = vld [vmem:[#allocation10 + $0xf8] sm:$0xff]
    %327 = vmatprep.subr.mxu0 %v296
    %328 = vmatpush1.msra.mxu0 %v295
    %329 = vmatprep.subr.mxu0 %v298
    %330 = vmatpush1.msra.mxu0 %v297
    %331 = vmatprep.subr.mxu0 %v300
    %332 = vmatpush1.msra.mxu0 %v299
    %333 = vmatprep.subr.mxu0 %v302
    %334 = vmatpush1.msra.mxu0 %v301
    %335 = vmatprep.subr.mxu0 %v304
    %336 = vmatpush1.msra.mxu0 %v303
    %337 = vmatprep.subr.mxu0 %v306
    %338 = vmatpush1.msra.mxu0 %v305
    %339 = vmatprep.subr.mxu0 %v308
    %340 = vmatpush1.msra.mxu0 %v307
    %341 = vmatprep.subr.mxu0 %v310
    %342 = vmatpush1.msra.mxu0 %v309
    %343 = vmatprep.subr.mxu0 %v312
    %344 = vmatpush1.msra.mxu0 %v311
    %345 = vmatprep.subr.mxu0 %v314
    %346 = vmatpush1.msra.mxu0 %v313
    %347 = vmatprep.subr.mxu0 %v316
    %348 = vmatpush1.msra.mxu0 %v315
    %349 = vmatprep.subr.mxu0 %v318
    %350 = vmatpush1.msra.mxu0 %v317
    %351 = vmatprep.subr.mxu0 %v320
    %352 = vmatpush1.msra.mxu0 %v319
    %353 = vmatprep.subr.mxu0 %v322
    %354 = vmatpush1.msra.mxu0 %v321
    %355 = vmatprep.subr.mxu0 %v324
    %356 = vmatpush1.msra.mxu0 %v323
    %357 = vmatprep.subr.mxu0 %v326
    %358 = vmatpush1.msra.mxu0 %v325
    %359 = vmatprep.subr.mxu0 0.0
    %360 = vmatpush1.msra.mxu0 0.0
    %361 = vmatprep.subr.mxu0 0.0
    %362 = vmatpush1.msra.mxu0 0.0
    %363 = vmatprep.subr.mxu0 0.0
    %364 = vmatpush1.msra.mxu0 0.0
    %365 = vmatprep.subr.mxu0 0.0
    %366 = vmatpush1.msra.mxu0 0.0
    %367 = vmatprep.subr.mxu0 0.0
    %368 = vmatpush1.msra.mxu0 0.0
    %369 = vmatprep.subr.mxu0 0.0
    %370 = vmatpush1.msra.mxu0 0.0
    %371 = vmatprep.subr.mxu0 0.0
    %372 = vmatpush1.msra.mxu0 0.0
    %373 = vmatprep.subr.mxu0 0.0
    %374 = vmatpush1.msra.mxu0 0.0
    %375 = vmatprep.subr.mxu0 0.0
    %376 = vmatpush1.msra.mxu0 0.0
    %377 = vmatprep.subr.mxu0 0.0
    %378 = vmatpush1.msra.mxu0 0.0
    %379 = vmatprep.subr.mxu0 0.0
    %380 = vmatpush1.msra.mxu0 0.0
    %381 = vmatprep.subr.mxu0 0.0
    %382 = vmatpush1.msra.mxu0 0.0
    %383 = vmatprep.subr.mxu0 0.0
    %384 = vmatpush1.msra.mxu0 0.0
    %385 = vmatprep.subr.mxu0 0.0
    %386 = vmatpush1.msra.mxu0 0.0
    %387 = vmatprep.subr.mxu0 0.0
    %388 = vmatpush1.msra.mxu0 0.0
    %389 = vmatprep.subr.mxu0 0.0
    %390 = vmatpush1.msra.mxu0 0.0
    %391 = vmatprep.mubr.f32.mxu0 0.0
    %392 = vmatmul.mubr.f32.gmra.mrb[0].mxu0 %v119
    %v393 = vpop.f32.mrb[0].mxu0
    %v394 = vadd.f32 0.0, %v393
    %v395 = vpop.f32.mrb[0].mxu0
    %v396 = vadd.f32 0.0, %v395
    %397 = vdwg.mxu0
    %v398 = vld [vmem:[#allocation7] sm:$0xff]
    %v399 = vld [vmem:[#allocation13] sm:$0xff]
    %v400 = vld [vmem:[#allocation13 + $0x8] sm:$0xff]
    %v401 = vld [vmem:[#allocation13 + $0x10] sm:$0xff]
    %v402 = vld [vmem:[#allocation13 + $0x18] sm:$0xff]
    %v403 = vld [vmem:[#allocation13 + $0x20] sm:$0xff]
    %v404 = vld [vmem:[#allocation13 + $0x28] sm:$0xff]
    %v405 = vld [vmem:[#allocation13 + $0x30] sm:$0xff]
    %v406 = vld [vmem:[#allocation13 + $0x38] sm:$0xff]
    %vm407 = vcmask 523264
    %v409 = vsel %vm407, %v398, 0
    %411 = vmatprep.subr.mxu0 0.0
    %412 = vmatpush1.msra.mxu0 %v399
    %413 = vmatprep.subr.mxu0 0.0
    %414 = vmatpush1.msra.mxu0 %v400
    %415 = vmatprep.subr.mxu0 0.0
    %416 = vmatpush1.msra.mxu0 %v401
    %417 = vmatprep.subr.mxu0 0.0
    %418 = vmatpush1.msra.mxu0 %v402
    %419 = vmatprep.subr.mxu0 0.0
    %420 = vmatpush1.msra.mxu0 %v403
    %421 = vmatprep.subr.mxu0 0.0
    %422 = vmatpush1.msra.mxu0 %v404
    %423 = vmatprep.subr.mxu0 0.0
    %424 = vmatpush1.msra.mxu0 %v405
    %425 = vmatprep.subr.mxu0 0.0
    %426 = vmatpush1.msra.mxu0 %v406
    %427 = vmatprep.subr.mxu0 0.0
    %428 = vmatpush1.msra.mxu0 0.0
    %429 = vmatprep.subr.mxu0 0.0
    %430 = vmatpush1.msra.mxu0 0.0
    %431 = vmatprep.subr.mxu0 0.0
    %432 = vmatpush1.msra.mxu0 0.0
    %433 = vmatprep.subr.mxu0 0.0
    %434 = vmatpush1.msra.mxu0 0.0
    %435 = vmatprep.subr.mxu0 0.0
    %436 = vmatpush1.msra.mxu0 0.0
    %437 = vmatprep.subr.mxu0 0.0
    %438 = vmatpush1.msra.mxu0 0.0
    %439 = vmatprep.subr.mxu0 0.0
    %440 = vmatpush1.msra.mxu0 0.0
    %441 = vmatprep.subr.mxu0 0.0
    %442 = vmatpush1.msra.mxu0 0.0
    %443 = vmatprep.subr.mxu0 0.0
    %444 = vmatpush1.msra.mxu0 0.0
    %445 = vmatprep.subr.mxu0 0.0
    %446 = vmatpush1.msra.mxu0 0.0
    %447 = vmatprep.subr.mxu0 0.0
    %448 = vmatpush1.msra.mxu0 0.0
    %449 = vmatprep.subr.mxu0 0.0
    %450 = vmatpush1.msra.mxu0 0.0
    %451 = vmatprep.subr.mxu0 0.0
    %452 = vmatpush1.msra.mxu0 0.0
    %453 = vmatprep.subr.mxu0 0.0
    %454 = vmatpush1.msra.mxu0 0.0
    %455 = vmatprep.subr.mxu0 0.0
    %456 = vmatpush1.msra.mxu0 0.0
    %457 = vmatprep.subr.mxu0 0.0
    %458 = vmatpush1.msra.mxu0 0.0
    %459 = vmatprep.subr.mxu0 0.0
    %460 = vmatpush1.msra.mxu0 0.0
    %461 = vmatprep.subr.mxu0 0.0
    %462 = vmatpush1.msra.mxu0 0.0
    %463 = vmatprep.subr.mxu0 0.0
    %464 = vmatpush1.msra.mxu0 0.0
    %465 = vmatprep.subr.mxu0 0.0
    %466 = vmatpush1.msra.mxu0 0.0
    %467 = vmatprep.subr.mxu0 0.0
    %468 = vmatpush1.msra.mxu0 0.0
    %469 = vmatprep.subr.mxu0 0.0
    %470 = vmatpush1.msra.mxu0 0.0
    %471 = vmatprep.subr.mxu0 0.0
    %472 = vmatpush1.msra.mxu0 0.0
    %473 = vmatprep.subr.mxu0 0.0
    %474 = vmatpush1.msra.mxu0 0.0
    %475 = vmatprep.mubr.f32.mxu0 0.0
    %476 = vmatmul.mubr.f32.gmra.mrb[0].mxu0 %v409
    %v477 = vpop.f32.mrb[0].mxu0
    %v478 = vadd.f32 0.0, %v477
    %v479 = vpop.f32.mrb[0].mxu0
    %480 = vdwg.mxu0
    %v481 = vadd.f32 %v221, %v394
    %v482 = vxor.u32 %v481, 2147483648
    %v483 = vmul.f32 %v482, 1.442695
    %v484 = vpow.pop %v483
    %v485 = vadd.f32 %v484, 1.0
    %v486 = vrcp.pop %v485
    %v487 = vmul.f32 1.0, %v486
    %v488 = vadd.f32 %v223, %v396
    %v489 = vxor.u32 %v488, 2147483648
    %v490 = vmul.f32 %v489, 1.442695
    %v491 = vpow.pop %v490
    %v492 = vadd.f32 %v491, 1.0
    %v493 = vrcp.pop %v492
    %v494 = vmul.f32 1.0, %v493
    %v495 = vmul.f32 %v494, %v119
    %v496 = vld [vmem:[#allocation11] sm:$0xff]
    %v497 = vld [vmem:[#allocation11 + $0x8] sm:$0xff]
    %v498 = vld [vmem:[#allocation11 + $0x10] sm:$0xff]
    %v499 = vld [vmem:[#allocation11 + $0x18] sm:$0xff]
    %v500 = vld [vmem:[#allocation11 + $0x20] sm:$0xff]
    %v501 = vld [vmem:[#allocation11 + $0x28] sm:$0xff]
    %v502 = vld [vmem:[#allocation11 + $0x30] sm:$0xff]
    %v503 = vld [vmem:[#allocation11 + $0x38] sm:$0xff]
    %v504 = vld [vmem:[#allocation11 + $0x40] sm:$0xff]
    %v505 = vld [vmem:[#allocation11 + $0x48] sm:$0xff]
    %v506 = vld [vmem:[#allocation11 + $0x50] sm:$0xff]
    %v507 = vld [vmem:[#allocation11 + $0x58] sm:$0xff]
    %v508 = vld [vmem:[#allocation11 + $0x60] sm:$0xff]
    %v509 = vld [vmem:[#allocation11 + $0x68] sm:$0xff]
    %v510 = vld [vmem:[#allocation11 + $0x70] sm:$0xff]
    %v511 = vld [vmem:[#allocation11 + $0x78] sm:$0xff]
    %512 = vmatprep.subr.mxu0 0.0
    %513 = vmatpush1.msra.mxu0 %v496
    %514 = vmatprep.subr.mxu0 0.0
    %515 = vmatpush1.msra.mxu0 %v497
    %516 = vmatprep.subr.mxu0 0.0
    %517 = vmatpush1.msra.mxu0 %v498
    %518 = vmatprep.subr.mxu0 0.0
    %519 = vmatpush1.msra.mxu0 %v499
    %520 = vmatprep.subr.mxu0 0.0
    %521 = vmatpush1.msra.mxu0 %v500
    %522 = vmatprep.subr.mxu0 0.0
    %523 = vmatpush1.msra.mxu0 %v501
    %524 = vmatprep.subr.mxu0 0.0
    %525 = vmatpush1.msra.mxu0 %v502
    %526 = vmatprep.subr.mxu0 0.0
    %527 = vmatpush1.msra.mxu0 %v503
    %528 = vmatprep.subr.mxu0 0.0
    %529 = vmatpush1.msra.mxu0 %v504
    %530 = vmatprep.subr.mxu0 0.0
    %531 = vmatpush1.msra.mxu0 %v505
    %532 = vmatprep.subr.mxu0 0.0
    %533 = vmatpush1.msra.mxu0 %v506
    %534 = vmatprep.subr.mxu0 0.0
    %535 = vmatpush1.msra.mxu0 %v507
    %536 = vmatprep.subr.mxu0 0.0
    %537 = vmatpush1.msra.mxu0 %v508
    %538 = vmatprep.subr.mxu0 0.0
    %539 = vmatpush1.msra.mxu0 %v509
    %540 = vmatprep.subr.mxu0 0.0
    %541 = vmatpush1.msra.mxu0 %v510
    %542 = vmatprep.subr.mxu0 0.0
    %543 = vmatpush1.msra.mxu0 %v511
    %544 = vmatprep.subr.mxu0 0.0
    %545 = vmatpush1.msra.mxu0 0.0
    %546 = vmatprep.subr.mxu0 0.0
    %547 = vmatpush1.msra.mxu0 0.0
    %548 = vmatprep.subr.mxu0 0.0
    %549 = vmatpush1.msra.mxu0 0.0
    %550 = vmatprep.subr.mxu0 0.0
    %551 = vmatpush1.msra.mxu0 0.0
    %552 = vmatprep.subr.mxu0 0.0
    %553 = vmatpush1.msra.mxu0 0.0
    %554 = vmatprep.subr.mxu0 0.0
    %555 = vmatpush1.msra.mxu0 0.0
    %556 = vmatprep.subr.mxu0 0.0
    %557 = vmatpush1.msra.mxu0 0.0
    %558 = vmatprep.subr.mxu0 0.0
    %559 = vmatpush1.msra.mxu0 0.0
    %560 = vmatprep.subr.mxu0 0.0
    %561 = vmatpush1.msra.mxu0 0.0
    %562 = vmatprep.subr.mxu0 0.0
    %563 = vmatpush1.msra.mxu0 0.0
    %564 = vmatprep.subr.mxu0 0.0
    %565 = vmatpush1.msra.mxu0 0.0
    %566 = vmatprep.subr.mxu0 0.0
    %567 = vmatpush1.msra.mxu0 0.0
    %568 = vmatprep.subr.mxu0 0.0
    %569 = vmatpush1.msra.mxu0 0.0
    %570 = vmatprep.subr.mxu0 0.0
    %571 = vmatpush1.msra.mxu0 0.0
    %572 = vmatprep.subr.mxu0 0.0
    %573 = vmatpush1.msra.mxu0 0.0
    %574 = vmatprep.subr.mxu0 0.0
    %575 = vmatpush1.msra.mxu0 0.0
    %576 = vmatprep.mubr.f32.mxu0 0.0
    %577 = vmatmul.mubr.f32.gmra.mrb[0].mxu0 %v495
    %v578 = vpop.f32.mrb[0].mxu0
    %v579 = vadd.f32 0.0, %v578
    %v580 = vpop.f32.mrb[0].mxu0
    %581 = vdwg.mxu0
    %v582 = vadd.f32 %v292, %v579
    %v583 = vadd.f32 %v582, %v478
    %v584 = vtanh.pop %v583
    %v585 = vsub.f32 1.0, %v487
    %v586 = vmul.f32 %v585, %v119
    %v587 = vmul.f32 %v487, %v584
    %v588 = vadd.f32 %v586, %v587
    %589 = vst [vmem:[#allocation14] sm:$0xff] %v588
    // Predicated region
    $region62: #{tpu_custom_call.1} parent=1 // pred_check
      _
    $region63: #{tpu_custom_call.1} parent=1 // pred_check_branch
      %591 = sbr.rel (0) target = $region65
    $region64: #{tpu_custom_call.1} parent=1 // pred_region
      %s593 = ssub.s32 128, 128
      %594 = vsyncadd [#allocation4], %s593
      %s596 = sshll.u32 [#allocation14], 4
      %s597 = int_to_ptr.vmem [resolvable:$true] %s596
      %599 = dma.vmem_to_hbm [thread:$0]  %s597, 128, %s8, [#allocation4]
    $region65: #{tpu_custom_call.1} parent=1 // pred_fallthru
      _
    // Predicated region
    $region66: #{tpu_custom_call.1} parent=1 // pred_check
      _
    $region67: #{tpu_custom_call.1} parent=1 // pred_check_branch
      %601 = sbr.rel (0) target = $region69
    $region68: #{tpu_custom_call.1} parent=1 // pred_region
      %602 = dma.done [#allocation4], 128
    $region69: #{tpu_custom_call.1} parent=1 // pred_fallthru
      _
    %603 = vsyncpa [#allocation3], 1
    %604 = vsyncpa [#allocation6], 1
    %605 = vsyncpa [#allocation9], 1
    %606 = vsyncpa [#allocation12], 1
    %607 = vsyncpa [#allocation4], 1

// kernel: tpu_custom_call.1
$region0: #{tpu_custom_call.1}
  #allocation0 [shape = 'u32[]', space=smem, size = 0x4, offset = 0x4, fixed_abs, tag = 'smem constant byte address 0x4 - core index']
  #allocation1 [shape = 'u32[144,128]{1,0:T(1,128)}', space=vmem, size = 0x12000, scoped, tag = 'internal scratch']
  %s0 = inlined_call_operand.hbm [shape: f32[8,32], index: 0, kind: input, shape index: {}]
  %s1 = inlined_call_operand.hbm [shape: f32[8,128], index: 1, kind: input, shape index: {}]
  %s2 = inlined_call_operand.hbm [shape: f32[8,64], index: 2, kind: input, shape index: {}]
  %s3 = inlined_call_operand.hbm [shape: f32[32,384], index: 3, kind: input, shape index: {}]
  %s4 = inlined_call_operand.hbm [shape: f32[128,256], index: 4, kind: input, shape index: {}]
  %s5 = inlined_call_operand.hbm [shape: f32[128,128], index: 5, kind: input, shape index: {}]
  %s6 = inlined_call_operand.hbm [shape: f32[64,128], index: 6, kind: input, shape index: {}]
  %s7 = inlined_call_operand.vmem [shape: f32[1,384], index: 7, kind: input, shape index: {}]
  %s8 = inlined_call_operand.hbm [shape: f32[8,128], index: 8, kind: output, shape index: {}]
  %s9 = sld [smem:[#allocation0]]
  $region70: #{tpu_custom_call.1} parent=0
    _
  %s11 = ssub.s32 1, %s9
  %s12 = scalar_select 0, %s11, %s9
  $region1: #{tpu_custom_call.1} parent=0
    #allocation2 [shape = 'u8[4096]{0}', space=vmem, size = 0x1000, scoped, tag = 'input window, operand 0, single buffered']
    #allocation3 [shape = 's32[1]{0}', space=sflag, size = 0x4, scoped, tag = 'scoped memory for tpu_custom_call.1']
    #allocation4 [shape = 's32[1]{0}', space=sflag, size = 0x4, scoped, tag = 'scoped memory for tpu_custom_call.1']
    #allocation5 [shape = 'u8[4096]{0}', space=vmem, size = 0x1000, scoped, tag = 'input window, operand 1, single buffered']
    #allocation6 [shape = 's32[1]{0}', space=sflag, size = 0x4, scoped, tag = 'scoped memory for tpu_custom_call.1']
    #allocation7 [shape = 'u8[4096]{0}', space=vmem, size = 0x1000, scoped, tag = 'input window, operand 2, single buffered']
    #allocation8 [shape = 'u8[49152]{0}', space=vmem, size = 0xc000, scoped, tag = 'input window, operand 3, single buffered']
    #allocation9 [shape = 's32[1]{0}', space=sflag, size = 0x4, scoped, tag = 'scoped memory for tpu_custom_call.1']
    #allocation10 [shape = 'u8[131072]{0}', space=vmem, size = 0x20000, scoped, tag = 'input window, operand 4, single buffered']
    #allocation11 [shape = 'u8[65536]{0}', space=vmem, size = 0x10000, scoped, tag = 'input window, operand 5, single buffered']
    #allocation12 [shape = 's32[1]{0}', space=sflag, size = 0x4, scoped, tag = 'scoped memory for tpu_custom_call.1']
    #allocation13 [shape = 'u8[32768]{0}', space=vmem, size = 0x8000, scoped, tag = 'input window, operand 6, single buffered']
    #allocation14 [shape = 'u8[4096]{0}', space=vmem, size = 0x1000, scoped, tag = 'output window, operand 0, single buffered']
    %13 = vsyncpa [#allocation3], 0
    %14 = vsyncpa [#allocation6], 0
    %15 = vsyncpa [#allocation9], 0
    %16 = vsyncpa [#allocation12], 0
    %17 = vsyncpa [#allocation4], 0
    // Predicated region
    $region2: #{tpu_custom_call.1} parent=1 // pred_check
      _
    $region3: #{tpu_custom_call.1} parent=1 // pred_check_branch
      %19 = sbr.rel (0) target = $region5
    $region4: #{tpu_custom_call.1} parent=1 // pred_region
      %s21 = ssub.s32 128, 128
      %22 = vsyncadd [#allocation3], %s21
      %s24 = sshll.u32 [#allocation2], 4
      %s25 = int_to_ptr.vmem [resolvable:$true] %s24
      %27 = dma.hbm_to_vmem [thread:$0]  %s0, 128, %s25, [#allocation3]
    $region5: #{tpu_custom_call.1} parent=1 // pred_fallthru
      _
    // Predicated region
    $region6: #{tpu_custom_call.1} parent=1 // pred_check
      _
    $region7: #{tpu_custom_call.1} parent=1 // pred_check_branch
      %29 = sbr.rel (0) target = $region9
    $region8: #{tpu_custom_call.1} parent=1 // pred_region
      %s31 = ssub.s32 128, 128
      %32 = vsyncadd [#allocation6], %s31
      %s34 = sshll.u32 [#allocation5], 4
      %s35 = int_to_ptr.vmem [resolvable:$true] %s34
      %37 = dma.hbm_to_vmem [thread:$0]  %s1, 128, %s35, [#allocation6]
    $region9: #{tpu_custom_call.1} parent=1 // pred_fallthru
      _
    // Predicated region
    $region10: #{tpu_custom_call.1} parent=1 // pred_check
      _
    $region11: #{tpu_custom_call.1} parent=1 // pred_check_branch
      %39 = sbr.rel (0) target = $region13
    $region12: #{tpu_custom_call.1} parent=1 // pred_region
      %s41 = ssub.s32 128, 128
      %42 = vsyncadd [#allocation6], %s41
      %s44 = sshll.u32 [#allocation7], 4
      %s45 = int_to_ptr.vmem [resolvable:$true] %s44
      %47 = dma.hbm_to_vmem [thread:$0]  %s2, 128, %s45, [#allocation6]
    $region13: #{tpu_custom_call.1} parent=1 // pred_fallthru
      _
    // Predicated region
    $region14: #{tpu_custom_call.1} parent=1 // pred_check
      _
    $region15: #{tpu_custom_call.1} parent=1 // pred_check_branch
      %49 = sbr.rel (0) target = $region17
    $region16: #{tpu_custom_call.1} parent=1 // pred_region
      %s51 = ssub.s32 1536, 1536
      %52 = vsyncadd [#allocation9], %s51
      %s53 = sshll.u32 [#allocation8], 4
      %s54 = int_to_ptr.vmem [resolvable:$true] %s53
      %59 = dma.hbm_to_vmem [thread:$0]  %s3, 1536, %s54, [#allocation9], 384, 384, 24
    $region17: #{tpu_custom_call.1} parent=1 // pred_fallthru
      _
    // Predicated region
    $region18: #{tpu_custom_call.1} parent=1 // pred_check
      _
    $region19: #{tpu_custom_call.1} parent=1 // pred_check_branch
      %61 = sbr.rel (0) target = $region21
    $region20: #{tpu_custom_call.1} parent=1 // pred_region
      %s63 = ssub.s32 4096, 4096
      %64 = vsyncadd [#allocation9], %s63
      %s65 = sshll.u32 [#allocation10], 4
      %s66 = int_to_ptr.vmem [resolvable:$true] %s65
      %71 = dma.hbm_to_vmem [thread:$0]  %s4, 4096, %s66, [#allocation9], 256, 256, 16
    $region21: #{tpu_custom_call.1} parent=1 // pred_fallthru
      _
    // Predicated region
    $region22: #{tpu_custom_call.1} parent=1 // pred_check
      _
    $region23: #{tpu_custom_call.1} parent=1 // pred_check_branch
      %73 = sbr.rel (0) target = $region25
    $region24: #{tpu_custom_call.1} parent=1 // pred_region
      %s75 = ssub.s32 2048, 2048
      %76 = vsyncadd [#allocation12], %s75
      %s77 = sshll.u32 [#allocation11], 4
      %s78 = int_to_ptr.vmem [resolvable:$true] %s77
      %83 = dma.hbm_to_vmem [thread:$0]  %s5, 2048, %s78, [#allocation12], 128, 128, 8
    $region25: #{tpu_custom_call.1} parent=1 // pred_fallthru
      _
    // Predicated region
    $region26: #{tpu_custom_call.1} parent=1 // pred_check
      _
    $region27: #{tpu_custom_call.1} parent=1 // pred_check_branch
      %85 = sbr.rel (0) target = $region29
    $region28: #{tpu_custom_call.1} parent=1 // pred_region
      %s87 = ssub.s32 1024, 1024
      %88 = vsyncadd [#allocation12], %s87
      %s89 = sshll.u32 [#allocation13], 4
      %s90 = int_to_ptr.vmem [resolvable:$true] %s89
      %95 = dma.hbm_to_vmem [thread:$0]  %s6, 1024, %s90, [#allocation12], 128, 128, 8
    $region29: #{tpu_custom_call.1} parent=1 // pred_fallthru
      _
    // Predicated region
    $region30: #{tpu_custom_call.1} parent=1 // pred_check
      _
    $region31: #{tpu_custom_call.1} parent=1 // pred_check_branch
      %97 = sbr.rel (0) target = $region33
    $region32: #{tpu_custom_call.1} parent=1 // pred_region
      _
    $region33: #{tpu_custom_call.1} parent=1 // pred_fallthru
      _
    // Predicated region
    $region34: #{tpu_custom_call.1} parent=1 // pred_check
      _
    $region35: #{tpu_custom_call.1} parent=1 // pred_check_branch
      %99 = sbr.rel (0) target = $region37
    $region36: #{tpu_custom_call.1} parent=1 // pred_region
      %100 = dma.done [#allocation3], 128
    $region37: #{tpu_custom_call.1} parent=1 // pred_fallthru
      _
    // Predicated region
    $region38: #{tpu_custom_call.1} parent=1 // pred_check
      _
    $region39: #{tpu_custom_call.1} parent=1 // pred_check_branch
      %102 = sbr.rel (0) target = $region41
    $region40: #{tpu_custom_call.1} parent=1 // pred_region
      %103 = dma.done [#allocation6], 128
    $region41: #{tpu_custom_call.1} parent=1 // pred_fallthru
      _
    // Predicated region
    $region42: #{tpu_custom_call.1} parent=1 // pred_check
      _
    $region43: #{tpu_custom_call.1} parent=1 // pred_check_branch
      %105 = sbr.rel (0) target = $region45
    $region44: #{tpu_custom_call.1} parent=1 // pred_region
      %106 = dma.done [#allocation6], 128
    $region45: #{tpu_custom_call.1} parent=1 // pred_fallthru
      _
    // Predicated region
    $region46: #{tpu_custom_call.1} parent=1 // pred_check
      _
    $region47: #{tpu_custom_call.1} parent=1 // pred_check_branch
      %108 = sbr.rel (0) target = $region49
    $region48: #{tpu_custom_call.1} parent=1 // pred_region
      %109 = dma.done [#allocation9], 1536
    $region49: #{tpu_custom_call.1} parent=1 // pred_fallthru
      _
    // Predicated region
    $region50: #{tpu_custom_call.1} parent=1 // pred_check
      _
    $region51: #{tpu_custom_call.1} parent=1 // pred_check_branch
      %111 = sbr.rel (0) target = $region53
    $region52: #{tpu_custom_call.1} parent=1 // pred_region
      %112 = dma.done [#allocation9], 4096
    $region53: #{tpu_custom_call.1} parent=1 // pred_fallthru
      _
    // Predicated region
    $region54: #{tpu_custom_call.1} parent=1 // pred_check
      _
    $region55: #{tpu_custom_call.1} parent=1 // pred_check_branch
      %114 = sbr.rel (0) target = $region57
    $region56: #{tpu_custom_call.1} parent=1 // pred_region
      %115 = dma.done [#allocation12], 2048
    $region57: #{tpu_custom_call.1} parent=1 // pred_fallthru
      _
    // Predicated region
    $region58: #{tpu_custom_call.1} parent=1 // pred_check
      _
    $region59: #{tpu_custom_call.1} parent=1 // pred_check_branch
      %117 = sbr.rel (0) target = $region61
    $region60: #{tpu_custom_call.1} parent=1 // pred_region
      %118 = dma.done [#allocation12], 1024
    $region61: #{tpu_custom_call.1} parent=1 // pred_fallthru
      _
    %v119 = vld [vmem:[#allocation5] sm:$0xff]
    %v120 = vld [vmem:[#allocation2] sm:$0xff]
    %v121 = vld [vmem:[#allocation8] sm:$0xff]
    %v122 = vld [vmem:[#allocation8 + $0x8] sm:$0xff]
    %v123 = vld [vmem:[#allocation8 + $0x10] sm:$0xff]
    %v124 = vld [vmem:[#allocation8 + $0x18] sm:$0xff]
    %v125 = vld [vmem:[#allocation8 + $0x20] sm:$0xff]
    %v126 = vld [vmem:[#allocation8 + $0x28] sm:$0xff]
    %v127 = vld [vmem:[#allocation8 + $0x30] sm:$0xff]
    %v128 = vld [vmem:[#allocation8 + $0x38] sm:$0xff]
    %v129 = vld [vmem:[#allocation8 + $0x40] sm:$0xff]
    %v130 = vld [vmem:[#allocation8 + $0x48] sm:$0xff]
    %v131 = vld [vmem:[#allocation8 + $0x50] sm:$0xff]
    %v132 = vld [vmem:[#allocation8 + $0x58] sm:$0xff]
    %v133 = vld [vmem:[%s7] sm:$0x7]
    %v135 = vlaneseq
    %v136 = vshrl.u32 %v135, 7
    %v137 = vsub.s32 0, %v136
    %v138 = vrot.slane %v133, %v137
    %v139 = vlaneseq
    %v140 = vshrl.u32 %v139, 7
    %v141 = vsub.s32 1, %v140
    %v142 = vrot.slane %v133, %v141
    %v143 = vlaneseq
    %v144 = vshrl.u32 %v143, 7
    %v145 = vsub.s32 2, %v144
    %v146 = vrot.slane %v133, %v145
    %vm150 = vcmask 261120
    %v152 = vsel %vm150, %v120, 0
    %154 = vmatprep.subr.mxu0 %v122
    %155 = vmatpush1.msra.mxu0 %v121
    %156 = vmatprep.subr.mxu0 %v125
    %157 = vmatpush1.msra.mxu0 %v124
    %158 = vmatprep.subr.mxu0 %v128
    %159 = vmatpush1.msra.mxu0 %v127
    %160 = vmatprep.subr.mxu0 %v131
    %161 = vmatpush1.msra.mxu0 %v130
    %162 = vmatprep.subr.mxu0 0.0
    %163 = vmatpush1.msra.mxu0 0.0
    %164 = vmatprep.subr.mxu0 0.0
    %165 = vmatpush1.msra.mxu0 0.0
    %166 = vmatprep.subr.mxu0 0.0
    %167 = vmatpush1.msra.mxu0 0.0
    %168 = vmatprep.subr.mxu0 0.0
    %169 = vmatpush1.msra.mxu0 0.0
    %170 = vmatprep.subr.mxu0 0.0
    %171 = vmatpush1.msra.mxu0 0.0
    %172 = vmatprep.subr.mxu0 0.0
    %173 = vmatpush1.msra.mxu0 0.0
    %174 = vmatprep.subr.mxu0 0.0
    %175 = vmatpush1.msra.mxu0 0.0
    %176 = vmatprep.subr.mxu0 0.0
    %177 = vmatpush1.msra.mxu0 0.0
    %178 = vmatprep.subr.mxu0 0.0
    %179 = vmatpush1.msra.mxu0 0.0
    %180 = vmatprep.subr.mxu0 0.0
    %181 = vmatpush1.msra.mxu0 0.0
    %182 = vmatprep.subr.mxu0 0.0
    %183 = vmatpush1.msra.mxu0 0.0
    %184 = vmatprep.subr.mxu0 0.0
    %185 = vmatpush1.msra.mxu0 0.0
    %186 = vmatprep.subr.mxu0 0.0
    %187 = vmatpush1.msra.mxu0 0.0
    %188 = vmatprep.subr.mxu0 0.0
    %189 = vmatpush1.msra.mxu0 0.0
    %190 = vmatprep.subr.mxu0 0.0
    %191 = vmatpush1.msra.mxu0 0.0
    %192 = vmatprep.subr.mxu0 0.0
    %193 = vmatpush1.msra.mxu0 0.0
    %194 = vmatprep.subr.mxu0 0.0
    %195 = vmatpush1.msra.mxu0 0.0
    %196 = vmatprep.subr.mxu0 0.0
    %197 = vmatpush1.msra.mxu0 0.0
    %198 = vmatprep.subr.mxu0 0.0
    %199 = vmatpush1.msra.mxu0 0.0
    %200 = vmatprep.subr.mxu0 0.0
    %201 = vmatpush1.msra.mxu0 0.0
    %202 = vmatprep.subr.mxu0 0.0
    %203 = vmatpush1.msra.mxu0 0.0
    %204 = vmatprep.subr.mxu0 0.0
    %205 = vmatpush1.msra.mxu0 0.0
    %206 = vmatprep.subr.mxu0 0.0
    %207 = vmatpush1.msra.mxu0 0.0
    %208 = vmatprep.subr.mxu0 0.0
    %209 = vmatpush1.msra.mxu0 0.0
    %210 = vmatprep.subr.mxu0 0.0
    %211 = vmatpush1.msra.mxu0 0.0
    %212 = vmatprep.subr.mxu0 0.0
    %213 = vmatpush1.msra.mxu0 0.0
    %214 = vmatprep.subr.mxu0 0.0
    %215 = vmatpush1.msra.mxu0 0.0
    %216 = vmatprep.subr.mxu0 0.0
    %217 = vmatpush1.msra.mxu0 0.0
    %218 = vmatprep.mubr.f32.mxu0 0.0
    %219 = vmatmul.mubr.f32.gmra.mrb[0].mxu0 %v152
    %v220 = vpop.f32.mrb[0].mxu0
    %v221 = vadd.f32 %v138, %v220
    %v222 = vpop.f32.mrb[0].mxu0
    %v223 = vadd.f32 %v142, %v222
    %224 = vdwg.mxu0
    %225 = vmatprep.subr.mxu0 0.0
    %226 = vmatpush1.msra.mxu0 %v123
    %227 = vmatprep.subr.mxu0 0.0
    %228 = vmatpush1.msra.mxu0 %v126
    %229 = vmatprep.subr.mxu0 0.0
    %230 = vmatpush1.msra.mxu0 %v129
    %231 = vmatprep.subr.mxu0 0.0
    %232 = vmatpush1.msra.mxu0 %v132
    %233 = vmatprep.subr.mxu0 0.0
    %234 = vmatpush1.msra.mxu0 0.0
    %235 = vmatprep.subr.mxu0 0.0
    %236 = vmatpush1.msra.mxu0 0.0
    %237 = vmatprep.subr.mxu0 0.0
    %238 = vmatpush1.msra.mxu0 0.0
    %239 = vmatprep.subr.mxu0 0.0
    %240 = vmatpush1.msra.mxu0 0.0
    %241 = vmatprep.subr.mxu0 0.0
    %242 = vmatpush1.msra.mxu0 0.0
    %243 = vmatprep.subr.mxu0 0.0
    %244 = vmatpush1.msra.mxu0 0.0
    %245 = vmatprep.subr.mxu0 0.0
    %246 = vmatpush1.msra.mxu0 0.0
    %247 = vmatprep.subr.mxu0 0.0
    %248 = vmatpush1.msra.mxu0 0.0
    %249 = vmatprep.subr.mxu0 0.0
    %250 = vmatpush1.msra.mxu0 0.0
    %251 = vmatprep.subr.mxu0 0.0
    %252 = vmatpush1.msra.mxu0 0.0
    %253 = vmatprep.subr.mxu0 0.0
    %254 = vmatpush1.msra.mxu0 0.0
    %255 = vmatprep.subr.mxu0 0.0
    %256 = vmatpush1.msra.mxu0 0.0
    %257 = vmatprep.subr.mxu0 0.0
    %258 = vmatpush1.msra.mxu0 0.0
    %259 = vmatprep.subr.mxu0 0.0
    %260 = vmatpush1.msra.mxu0 0.0
    %261 = vmatprep.subr.mxu0 0.0
    %262 = vmatpush1.msra.mxu0 0.0
    %263 = vmatprep.subr.mxu0 0.0
    %264 = vmatpush1.msra.mxu0 0.0
    %265 = vmatprep.subr.mxu0 0.0
    %266 = vmatpush1.msra.mxu0 0.0
    %267 = vmatprep.subr.mxu0 0.0
    %268 = vmatpush1.msra.mxu0 0.0
    %269 = vmatprep.subr.mxu0 0.0
    %270 = vmatpush1.msra.mxu0 0.0
    %271 = vmatprep.subr.mxu0 0.0
    %272 = vmatpush1.msra.mxu0 0.0
    %273 = vmatprep.subr.mxu0 0.0
    %274 = vmatpush1.msra.mxu0 0.0
    %275 = vmatprep.subr.mxu0 0.0
    %276 = vmatpush1.msra.mxu0 0.0
    %277 = vmatprep.subr.mxu0 0.0
    %278 = vmatpush1.msra.mxu0 0.0
    %279 = vmatprep.subr.mxu0 0.0
    %280 = vmatpush1.msra.mxu0 0.0
    %281 = vmatprep.subr.mxu0 0.0
    %282 = vmatpush1.msra.mxu0 0.0
    %283 = vmatprep.subr.mxu0 0.0
    %284 = vmatpush1.msra.mxu0 0.0
    %285 = vmatprep.subr.mxu0 0.0
    %286 = vmatpush1.msra.mxu0 0.0
    %287 = vmatprep.subr.mxu0 0.0
    %288 = vmatpush1.msra.mxu0 0.0
    %289 = vmatprep.mubr.f32.mxu0 0.0
    %290 = vmatmul.mubr.f32.gmra.mrb[0].mxu0 %v152
    %v291 = vpop.f32.mrb[0].mxu0
    %v292 = vadd.f32 %v146, %v291
    %v293 = vpop.f32.mrb[0].mxu0
    %294 = vdwg.mxu0
    %v295 = vld [vmem:[#allocation10] sm:$0xff]
    %v296 = vld [vmem:[#allocation10 + $0x8] sm:$0xff]
    %v297 = vld [vmem:[#allocation10 + $0x10] sm:$0xff]
    %v298 = vld [vmem:[#allocation10 + $0x18] sm:$0xff]
    %v299 = vld [vmem:[#allocation10 + $0x20] sm:$0xff]
    %v300 = vld [vmem:[#allocation10 + $0x28] sm:$0xff]
    %v301 = vld [vmem:[#allocation10 + $0x30] sm:$0xff]
    %v302 = vld [vmem:[#allocation10 + $0x38] sm:$0xff]
    %v303 = vld [vmem:[#allocation10 + $0x40] sm:$0xff]
    %v304 = vld [vmem:[#allocation10 + $0x48] sm:$0xff]
    %v305 = vld [vmem:[#allocation10 + $0x50] sm:$0xff]
    %v306 = vld [vmem:[#allocation10 + $0x58] sm:$0xff]
    %v307 = vld [vmem:[#allocation10 + $0x60] sm:$0xff]
    %v308 = vld [vmem:[#allocation10 + $0x68] sm:$0xff]
    %v309 = vld [vmem:[#allocation10 + $0x70] sm:$0xff]
    %v310 = vld [vmem:[#allocation10 + $0x78] sm:$0xff]
    %v311 = vld [vmem:[#allocation10 + $0x80] sm:$0xff]
    %v312 = vld [vmem:[#allocation10 + $0x88] sm:$0xff]
    %v313 = vld [vmem:[#allocation10 + $0x90] sm:$0xff]
    %v314 = vld [vmem:[#allocation10 + $0x98] sm:$0xff]
    %v315 = vld [vmem:[#allocation10 + $0xa0] sm:$0xff]
    %v316 = vld [vmem:[#allocation10 + $0xa8] sm:$0xff]
    %v317 = vld [vmem:[#allocation10 + $0xb0] sm:$0xff]
    %v318 = vld [vmem:[#allocation10 + $0xb8] sm:$0xff]
    %v319 = vld [vmem:[#allocation10 + $0xc0] sm:$0xff]
    %v320 = vld [vmem:[#allocation10 + $0xc8] sm:$0xff]
    %v321 = vld [vmem:[#allocation10 + $0xd0] sm:$0xff]
    %v322 = vld [vmem:[#allocation10 + $0xd8] sm:$0xff]
    %v323 = vld [vmem:[#allocation10 + $0xe0] sm:$0xff]
    %v324 = vld [vmem:[#allocation10 + $0xe8] sm:$0xff]
    %v325 = vld [vmem:[#allocation10 + $0xf0] sm:$0xff]
    %v326 = vld [vmem:[#allocation10 + $0xf8] sm:$0xff]
    %327 = vmatprep.subr.mxu0 %v296
    %328 = vmatpush1.msra.mxu0 %v295
    %329 = vmatprep.subr.mxu0 %v298
    %330 = vmatpush1.msra.mxu0 %v297
    %331 = vmatprep.subr.mxu0 %v300
    %332 = vmatpush1.msra.mxu0 %v299
    %333 = vmatprep.subr.mxu0 %v302
    %334 = vmatpush1.msra.mxu0 %v301
    %335 = vmatprep.subr.mxu0 %v304
    %336 = vmatpush1.msra.mxu0 %v303
    %337 = vmatprep.subr.mxu0 %v306
    %338 = vmatpush1.msra.mxu0 %v305
    %339 = vmatprep.subr.mxu0 %v308
    %340 = vmatpush1.msra.mxu0 %v307
    %341 = vmatprep.subr.mxu0 %v310
    %342 = vmatpush1.msra.mxu0 %v309
    %343 = vmatprep.subr.mxu0 %v312
    %344 = vmatpush1.msra.mxu0 %v311
    %345 = vmatprep.subr.mxu0 %v314
    %346 = vmatpush1.msra.mxu0 %v313
    %347 = vmatprep.subr.mxu0 %v316
    %348 = vmatpush1.msra.mxu0 %v315
    %349 = vmatprep.subr.mxu0 %v318
    %350 = vmatpush1.msra.mxu0 %v317
    %351 = vmatprep.subr.mxu0 %v320
    %352 = vmatpush1.msra.mxu0 %v319
    %353 = vmatprep.subr.mxu0 %v322
    %354 = vmatpush1.msra.mxu0 %v321
    %355 = vmatprep.subr.mxu0 %v324
    %356 = vmatpush1.msra.mxu0 %v323
    %357 = vmatprep.subr.mxu0 %v326
    %358 = vmatpush1.msra.mxu0 %v325
    %359 = vmatprep.subr.mxu0 0.0
    %360 = vmatpush1.msra.mxu0 0.0
    %361 = vmatprep.subr.mxu0 0.0
    %362 = vmatpush1.msra.mxu0 0.0
    %363 = vmatprep.subr.mxu0 0.0
    %364 = vmatpush1.msra.mxu0 0.0
    %365 = vmatprep.subr.mxu0 0.0
    %366 = vmatpush1.msra.mxu0 0.0
    %367 = vmatprep.subr.mxu0 0.0
    %368 = vmatpush1.msra.mxu0 0.0
    %369 = vmatprep.subr.mxu0 0.0
    %370 = vmatpush1.msra.mxu0 0.0
    %371 = vmatprep.subr.mxu0 0.0
    %372 = vmatpush1.msra.mxu0 0.0
    %373 = vmatprep.subr.mxu0 0.0
    %374 = vmatpush1.msra.mxu0 0.0
    %375 = vmatprep.subr.mxu0 0.0
    %376 = vmatpush1.msra.mxu0 0.0
    %377 = vmatprep.subr.mxu0 0.0
    %378 = vmatpush1.msra.mxu0 0.0
    %379 = vmatprep.subr.mxu0 0.0
    %380 = vmatpush1.msra.mxu0 0.0
    %381 = vmatprep.subr.mxu0 0.0
    %382 = vmatpush1.msra.mxu0 0.0
    %383 = vmatprep.subr.mxu0 0.0
    %384 = vmatpush1.msra.mxu0 0.0
    %385 = vmatprep.subr.mxu0 0.0
    %386 = vmatpush1.msra.mxu0 0.0
    %387 = vmatprep.subr.mxu0 0.0
    %388 = vmatpush1.msra.mxu0 0.0
    %389 = vmatprep.subr.mxu0 0.0
    %390 = vmatpush1.msra.mxu0 0.0
    %391 = vmatprep.mubr.f32.mxu0 0.0
    %392 = vmatmul.mubr.f32.gmra.mrb[0].mxu0 %v119
    %v393 = vpop.f32.mrb[0].mxu0
    %v394 = vadd.f32 0.0, %v393
    %v395 = vpop.f32.mrb[0].mxu0
    %v396 = vadd.f32 0.0, %v395
    %397 = vdwg.mxu0
    %v398 = vld [vmem:[#allocation7] sm:$0xff]
    %v399 = vld [vmem:[#allocation13] sm:$0xff]
    %v400 = vld [vmem:[#allocation13 + $0x8] sm:$0xff]
    %v401 = vld [vmem:[#allocation13 + $0x10] sm:$0xff]
    %v402 = vld [vmem:[#allocation13 + $0x18] sm:$0xff]
    %v403 = vld [vmem:[#allocation13 + $0x20] sm:$0xff]
    %v404 = vld [vmem:[#allocation13 + $0x28] sm:$0xff]
    %v405 = vld [vmem:[#allocation13 + $0x30] sm:$0xff]
    %v406 = vld [vmem:[#allocation13 + $0x38] sm:$0xff]
    %vm407 = vcmask 523264
    %v409 = vsel %vm407, %v398, 0
    %411 = vmatprep.subr.mxu0 0.0
    %412 = vmatpush1.msra.mxu0 %v399
    %413 = vmatprep.subr.mxu0 0.0
    %414 = vmatpush1.msra.mxu0 %v400
    %415 = vmatprep.subr.mxu0 0.0
    %416 = vmatpush1.msra.mxu0 %v401
    %417 = vmatprep.subr.mxu0 0.0
    %418 = vmatpush1.msra.mxu0 %v402
    %419 = vmatprep.subr.mxu0 0.0
    %420 = vmatpush1.msra.mxu0 %v403
    %421 = vmatprep.subr.mxu0 0.0
    %422 = vmatpush1.msra.mxu0 %v404
    %423 = vmatprep.subr.mxu0 0.0
    %424 = vmatpush1.msra.mxu0 %v405
    %425 = vmatprep.subr.mxu0 0.0
    %426 = vmatpush1.msra.mxu0 %v406
    %427 = vmatprep.subr.mxu0 0.0
    %428 = vmatpush1.msra.mxu0 0.0
    %429 = vmatprep.subr.mxu0 0.0
    %430 = vmatpush1.msra.mxu0 0.0
    %431 = vmatprep.subr.mxu0 0.0
    %432 = vmatpush1.msra.mxu0 0.0
    %433 = vmatprep.subr.mxu0 0.0
    %434 = vmatpush1.msra.mxu0 0.0
    %435 = vmatprep.subr.mxu0 0.0
    %436 = vmatpush1.msra.mxu0 0.0
    %437 = vmatprep.subr.mxu0 0.0
    %438 = vmatpush1.msra.mxu0 0.0
    %439 = vmatprep.subr.mxu0 0.0
    %440 = vmatpush1.msra.mxu0 0.0
    %441 = vmatprep.subr.mxu0 0.0
    %442 = vmatpush1.msra.mxu0 0.0
    %443 = vmatprep.subr.mxu0 0.0
    %444 = vmatpush1.msra.mxu0 0.0
    %445 = vmatprep.subr.mxu0 0.0
    %446 = vmatpush1.msra.mxu0 0.0
    %447 = vmatprep.subr.mxu0 0.0
    %448 = vmatpush1.msra.mxu0 0.0
    %449 = vmatprep.subr.mxu0 0.0
    %450 = vmatpush1.msra.mxu0 0.0
    %451 = vmatprep.subr.mxu0 0.0
    %452 = vmatpush1.msra.mxu0 0.0
    %453 = vmatprep.subr.mxu0 0.0
    %454 = vmatpush1.msra.mxu0 0.0
    %455 = vmatprep.subr.mxu0 0.0
    %456 = vmatpush1.msra.mxu0 0.0
    %457 = vmatprep.subr.mxu0 0.0
    %458 = vmatpush1.msra.mxu0 0.0
    %459 = vmatprep.subr.mxu0 0.0
    %460 = vmatpush1.msra.mxu0 0.0
    %461 = vmatprep.subr.mxu0 0.0
    %462 = vmatpush1.msra.mxu0 0.0
    %463 = vmatprep.subr.mxu0 0.0
    %464 = vmatpush1.msra.mxu0 0.0
    %465 = vmatprep.subr.mxu0 0.0
    %466 = vmatpush1.msra.mxu0 0.0
    %467 = vmatprep.subr.mxu0 0.0
    %468 = vmatpush1.msra.mxu0 0.0
    %469 = vmatprep.subr.mxu0 0.0
    %470 = vmatpush1.msra.mxu0 0.0
    %471 = vmatprep.subr.mxu0 0.0
    %472 = vmatpush1.msra.mxu0 0.0
    %473 = vmatprep.subr.mxu0 0.0
    %474 = vmatpush1.msra.mxu0 0.0
    %475 = vmatprep.mubr.f32.mxu0 0.0
    %476 = vmatmul.mubr.f32.gmra.mrb[0].mxu0 %v409
    %v477 = vpop.f32.mrb[0].mxu0
    %v478 = vadd.f32 0.0, %v477
    %v479 = vpop.f32.mrb[0].mxu0
    %480 = vdwg.mxu0
    %v481 = vadd.f32 %v221, %v394
    %v482 = vxor.u32 %v481, 2147483648
    %v483 = vmul.f32 %v482, 1.442695
    %v484 = vpow.pop %v483
    %v485 = vadd.f32 %v484, 1.0
    %v486 = vrcp.pop %v485
    %v487 = vmul.f32 1.0, %v486
    %v488 = vadd.f32 %v223, %v396
    %v489 = vxor.u32 %v488, 2147483648
    %v490 = vmul.f32 %v489, 1.442695
    %v491 = vpow.pop %v490
    %v492 = vadd.f32 %v491, 1.0
    %v493 = vrcp.pop %v492
    %v494 = vmul.f32 1.0, %v493
    %v495 = vmul.f32 %v494, %v119
    %v496 = vld [vmem:[#allocation11] sm:$0xff]
    %v497 = vld [vmem:[#allocation11 + $0x8] sm:$0xff]
    %v498 = vld [vmem:[#allocation11 + $0x10] sm:$0xff]
    %v499 = vld [vmem:[#allocation11 + $0x18] sm:$0xff]
    %v500 = vld [vmem:[#allocation11 + $0x20] sm:$0xff]
    %v501 = vld [vmem:[#allocation11 + $0x28] sm:$0xff]
    %v502 = vld [vmem:[#allocation11 + $0x30] sm:$0xff]
    %v503 = vld [vmem:[#allocation11 + $0x38] sm:$0xff]
    %v504 = vld [vmem:[#allocation11 + $0x40] sm:$0xff]
    %v505 = vld [vmem:[#allocation11 + $0x48] sm:$0xff]
    %v506 = vld [vmem:[#allocation11 + $0x50] sm:$0xff]
    %v507 = vld [vmem:[#allocation11 + $0x58] sm:$0xff]
    %v508 = vld [vmem:[#allocation11 + $0x60] sm:$0xff]
    %v509 = vld [vmem:[#allocation11 + $0x68] sm:$0xff]
    %v510 = vld [vmem:[#allocation11 + $0x70] sm:$0xff]
    %v511 = vld [vmem:[#allocation11 + $0x78] sm:$0xff]
    %512 = vmatprep.subr.mxu0 0.0
    %513 = vmatpush1.msra.mxu0 %v496
    %514 = vmatprep.subr.mxu0 0.0
    %515 = vmatpush1.msra.mxu0 %v497
    %516 = vmatprep.subr.mxu0 0.0
    %517 = vmatpush1.msra.mxu0 %v498
    %518 = vmatprep.subr.mxu0 0.0
    %519 = vmatpush1.msra.mxu0 %v499
    %520 = vmatprep.subr.mxu0 0.0
    %521 = vmatpush1.msra.mxu0 %v500
    %522 = vmatprep.subr.mxu0 0.0
    %523 = vmatpush1.msra.mxu0 %v501
    %524 = vmatprep.subr.mxu0 0.0
    %525 = vmatpush1.msra.mxu0 %v502
    %526 = vmatprep.subr.mxu0 0.0
    %527 = vmatpush1.msra.mxu0 %v503
    %528 = vmatprep.subr.mxu0 0.0
    %529 = vmatpush1.msra.mxu0 %v504
    %530 = vmatprep.subr.mxu0 0.0
    %531 = vmatpush1.msra.mxu0 %v505
    %532 = vmatprep.subr.mxu0 0.0
    %533 = vmatpush1.msra.mxu0 %v506
    %534 = vmatprep.subr.mxu0 0.0
    %535 = vmatpush1.msra.mxu0 %v507
    %536 = vmatprep.subr.mxu0 0.0
    %537 = vmatpush1.msra.mxu0 %v508
    %538 = vmatprep.subr.mxu0 0.0
    %539 = vmatpush1.msra.mxu0 %v509
    %540 = vmatprep.subr.mxu0 0.0
    %541 = vmatpush1.msra.mxu0 %v510
    %542 = vmatprep.subr.mxu0 0.0
    %543 = vmatpush1.msra.mxu0 %v511
    %544 = vmatprep.subr.mxu0 0.0
    %545 = vmatpush1.msra.mxu0 0.0
    %546 = vmatprep.subr.mxu0 0.0
    %547 = vmatpush1.msra.mxu0 0.0
    %548 = vmatprep.subr.mxu0 0.0
    %549 = vmatpush1.msra.mxu0 0.0
    %550 = vmatprep.subr.mxu0 0.0
    %551 = vmatpush1.msra.mxu0 0.0
    %552 = vmatprep.subr.mxu0 0.0
    %553 = vmatpush1.msra.mxu0 0.0
    %554 = vmatprep.subr.mxu0 0.0
    %555 = vmatpush1.msra.mxu0 0.0
    %556 = vmatprep.subr.mxu0 0.0
    %557 = vmatpush1.msra.mxu0 0.0
    %558 = vmatprep.subr.mxu0 0.0
    %559 = vmatpush1.msra.mxu0 0.0
    %560 = vmatprep.subr.mxu0 0.0
    %561 = vmatpush1.msra.mxu0 0.0
    %562 = vmatprep.subr.mxu0 0.0
    %563 = vmatpush1.msra.mxu0 0.0
    %564 = vmatprep.subr.mxu0 0.0
    %565 = vmatpush1.msra.mxu0 0.0
    %566 = vmatprep.subr.mxu0 0.0
    %567 = vmatpush1.msra.mxu0 0.0
    %568 = vmatprep.subr.mxu0 0.0
    %569 = vmatpush1.msra.mxu0 0.0
    %570 = vmatprep.subr.mxu0 0.0
    %571 = vmatpush1.msra.mxu0 0.0
    %572 = vmatprep.subr.mxu0 0.0
    %573 = vmatpush1.msra.mxu0 0.0
    %574 = vmatprep.subr.mxu0 0.0
    %575 = vmatpush1.msra.mxu0 0.0
    %576 = vmatprep.mubr.f32.mxu0 0.0
    %577 = vmatmul.mubr.f32.gmra.mrb[0].mxu0 %v495
    %v578 = vpop.f32.mrb[0].mxu0
    %v579 = vadd.f32 0.0, %v578
    %v580 = vpop.f32.mrb[0].mxu0
    %581 = vdwg.mxu0
    %v582 = vadd.f32 %v292, %v579
    %v583 = vadd.f32 %v582, %v478
    %v584 = vtanh.pop %v583
    %v585 = vsub.f32 1.0, %v487
    %v586 = vmul.f32 %v585, %v119
    %v587 = vmul.f32 %v487, %v584
    %v588 = vadd.f32 %v586, %v587
    %589 = vst [vmem:[#allocation14] sm:$0xff] %v588
    // Predicated region
    $region62: #{tpu_custom_call.1} parent=1 // pred_check
      _
    $region63: #{tpu_custom_call.1} parent=1 // pred_check_branch
      %591 = sbr.rel (0) target = $region65
    $region64: #{tpu_custom_call.1} parent=1 // pred_region
      %s593 = ssub.s32 128, 128
      %594 = vsyncadd [#allocation4], %s593
      %s596 = sshll.u32 [#allocation14], 4
      %s597 = int_to_ptr.vmem [resolvable:$true] %s596
      %599 = dma.vmem_to_hbm [thread:$0]  %s597, 128, %s8, [#allocation4]
    $region65: #{tpu_custom_call.1} parent=1 // pred_fallthru
      _
    // Predicated region
    $region66: #{tpu_custom_call.1} parent=1 // pred_check
      _
    $region67: #{tpu_custom_call.1} parent=1 // pred_check_branch
      %601 = sbr.rel (0) target = $region69
    $region68: #{tpu_custom_call.1} parent=1 // pred_region
      %602 = dma.done [#allocation4], 128
    $region69: #{tpu_custom_call.1} parent=1 // pred_fallthru
      _
    %603 = vsyncpa [#allocation3], 1
    %604 = vsyncpa [#allocation6], 1
    %605 = vsyncpa [#allocation9], 1
    %606 = vsyncpa [#allocation12], 1
    %607 = vsyncpa [#allocation4], 1

</llo_original>
